<compile_context>
chip_gen: v7x
topology: tpu7x:2x2x1
jax: 0.10.0
libtpu: 0.0.40
codegen_flags: <defaults>
</compile_context>

<pallas_src>
import math

import jax
import jax.numpy as jnp
from jax.experimental import pallas as pl
from jax.experimental.pallas import tpu as pltpu


def _round_up(x, m):
    return ((x + m - 1) // m) * m


def _cdiv(a, b):
    return (a + b - 1) // b


# ----------------------------------------------------------------------------
# Wrapper: host-side weight packing + pallas_call
# ----------------------------------------------------------------------------
def lwdetr_head(hs, ref_unsigmoid, params, *, aux_loss=True, tm=1024):
    L, B, Q, D = hs.shape
    C = params["wc"].shape[1]

    Dp = _round_up(D, 128)   # lane-aligned hidden width (fused-matmul split point)
    Cp = _round_up(C, 128)   # lane-aligned class width inside the fused matmul
    CO = 128                 # lane-aligned bbox-delta width (4 real lanes)

    rows = L * B * Q

    # ---- row-tile size -------------------------------------------------------
    # Even number of grid steps (>= 2) so v7x's two TensorCores both get work;
    # a large TM amortizes the ~0.35 us per-grid-step overhead.  The final
    # block may be partial (Pallas masks it), so no host-side row padding.
    steps = max(2, 2 * _cdiv(rows, 2 * max(16, tm)))
    tm = min(_round_up(_cdiv(rows, steps), 16), _round_up(rows, 16))
    grid = _cdiv(rows, tm)

    # ---- activations ---------------------------------------------------------
    # bf16 hs: dominant HBM read, and the MXU operands are bf16 anyway.
    # TODO(synk): ideally the external transformer already emits bf16 hs so this
    # cast fuses into its producer instead of being a standalone convert.
    hs_f = hs.reshape(rows, D).astype(jnp.bfloat16)
    ref_f = ref_unsigmoid.reshape(rows, 4).astype(jnp.float32)

    # ---- pack / pad weights (host side, negligible) ---------------------------
    # Fused first matmul: [ w1 | 0 | wc | 0 ] -> one MXU pass gives both the
    # bbox-MLP first layer pre-activation and the class logits.
    wa = jnp.zeros((D, Dp + Cp), jnp.float32)
    wa = wa.at[:, :D].set(params["w1"]).at[:, Dp:Dp + C].set(params["wc"])
    ba = jnp.zeros((1, Dp + Cp), jnp.float32)
    ba = ba.at[:, :D].set(params["b1"]).at[:, Dp:Dp + C].set(params["bc"])

    w2 = jnp.zeros((Dp, Dp), jnp.float32).at[:D, :D].set(params["w2"])
    b2 = jnp.zeros((1, Dp), jnp.float32).at[:, :D].set(params["b2"])
    w3 = jnp.zeros((Dp, CO), jnp.float32).at[:D, :4].set(params["w3"])
    b3 = jnp.zeros((1, CO), jnp.float32).at[:, :4].set(params["b3"])

    wa_bf = wa.astype(jnp.bfloat16)
    w2_bf = w2.astype(jnp.bfloat16)
    w3_bf = w3.astype(jnp.bfloat16)

    # ---- fused detection-head kernel (one (TM, .) row block per grid step) ----
    def kernel(hs_ref, ref_ref, wa_ref, ba_ref, w2_ref, b2_ref, w3_ref, b3_ref,
               logits_ref, coord_ref):
        x = hs_ref[...]                                             # (TM, D) bf16

        # Fused:  x @ [w1 | wc]  -> h1 pre-activation and class logits.
        fused = jnp.dot(x, wa_ref[...],
                        preferred_element_type=jnp.float32) + ba_ref[...]
        h1 = jnp.maximum(fused[:, :Dp], 0.0)                        # (TM, Dp) f32
        logits = fused[:, Dp:Dp + C]                                # (TM, C)  f32

        # bbox_embed layers 1, 2 (bf16 MXU operands, f32 accumulation).
        h2 = jnp.dot(h1.astype(jnp.bfloat16), w2_ref[...],
                     preferred_element_type=jnp.float32) + b2_ref[...]
        h2 = jnp.maximum(h2, 0.0)                                   # (TM, Dp)
        delta = jnp.dot(h2.astype(jnp.bfloat16), w3_ref[...],
                        preferred_element_type=jnp.float32) + b3_ref[...]

        # outputs_coord = sigmoid(bbox_embed(hs) + ref_unsigmoid)  (bbox_reparam=False)
        coord = jax.nn.sigmoid(delta[:, :4] + ref_ref[...])        # (TM, 4) f32

        logits_ref[...] = logits.astype(logits_ref.dtype)
        coord_ref[...] = coord.astype(coord_ref.dtype)

    cost = pl.CostEstimate(
        flops=int(2 * rows * (D * (Dp + Cp) + Dp * Dp + Dp * CO)),
        transcendentals=int(rows * 4),
        bytes_accessed=int(rows * (D * 2 + 4 * 4 + C * 4 + 4 * 4)
                           + (wa.size + w2.size + w3.size) * 2
                           + (ba.size + b2.size + b3.size) * 4),
    )

    def run(weight_pipeline_mode):
        def wspec(shape):
            nd = len(shape)
            idx = lambda i, _nd=nd: (0,) * _nd          # resident across the grid
            if weight_pipeline_mode is None:
                return pl.BlockSpec(shape, idx)
            return pl.BlockSpec(shape, idx, pipeline_mode=weight_pipeline_mode)

        return pl.pallas_call(
            kernel,
            out_shape=(
                jax.ShapeDtypeStruct((rows, C), jnp.float32),
                jax.ShapeDtypeStruct((rows, 4), jnp.float32),
            ),
            grid_spec=pltpu.PrefetchScalarGridSpec(
                num_scalar_prefetch=0,
                grid=(grid,),
                in_specs=[
                    pl.BlockSpec((tm, D), lambda i: (i, 0)),
                    pl.BlockSpec((tm, 4), lambda i: (i, 0)),
                    wspec((D, Dp + Cp)), wspec((1, Dp + Cp)),
                    wspec((Dp, Dp)), wspec((1, Dp)),
                    wspec((Dp, CO)), wspec((1, CO)),
                ],
                out_specs=[
                    pl.BlockSpec((tm, C), lambda i: (i, 0)),
                    pl.BlockSpec((tm, 4), lambda i: (i, 0)),
                ],
            ),
            compiler_params=pltpu.CompilerParams(
                dimension_semantics=("parallel",),
                vmem_limit_bytes=64 * 1024 * 1024),
            cost_estimate=cost,
        )(hs_f, ref_f, wa_bf, ba, w2_bf, b2, w3_bf, b3)

    try:
        # Grid-resident weights only need one VMEM buffer (frees VMEM, esp. v7x).
        logits_f, coord_f = run(pl.Buffered(1))
        jax.block_until_ready((logits_f, coord_f))
    except Exception:
        # Fallback for JAX/Mosaic versions without Buffered pipeline_mode support.
        logits_f, coord_f = run(None)

    outputs_class = logits_f.reshape(L, B, Q, C)
    outputs_coord = coord_f.reshape(L, B, Q, 4)

    out = {"pred_logits": outputs_class[-1], "pred_boxes": outputs_coord[-1]}
    if aux_loss:
        out["aux_outputs"] = [
            {"pred_logits": a, "pred_boxes": b}
            for a, b in zip(outputs_class[:-1], outputs_coord[:-1])
        ]
    return out


# ----------------------------------------------------------------------------
# Deterministic parameter init (mirrors LWDETR.__init__ constant inits)
# ----------------------------------------------------------------------------
def init_params(key, hidden_dim, num_classes, num_queries=8, group_detr=1):
    prior_prob = 0.01
    bias_value = -math.log((1 - prior_prob) / prior_prob)

    def linear_w(k, n_in, n_out):
        bound = 1.0 / math.sqrt(n_in)
        return jax.random.uniform(k, (n_in, n_out), jnp.float32, -bound, bound)

    def linear_b(k, n_in, n_out):
        bound = 1.0 / math.sqrt(n_in)
        return jax.random.uniform(k, (1, n_out), jnp.float32, -bound, bound)

    ks = jax.random.split(key, 8)
    params = {
        # bbox_embed MLP layers 0,1 (default nn.Linear init)
        "w1": linear_w(ks[0], hidden_dim, hidden_dim),
        "b1": linear_b(ks[1], hidden_dim, hidden_dim),
        "w2": linear_w(ks[2], hidden_dim, hidden_dim),
        "b2": linear_b(ks[3], hidden_dim, hidden_dim),
        # bbox_embed last layer: nn.init.constant_(..., 0)
        "w3": jnp.zeros((hidden_dim, 4), jnp.float32),
        "b3": jnp.zeros((1, 4), jnp.float32),
        # class_embed: random weight, bias = -log((1-p)/p)
        "wc": linear_w(ks[4], hidden_dim, num_classes),
        "bc": jnp.full((1, num_classes), bias_value, jnp.float32),
        # unused by the head itself (consumed by the external transformer):
        # refpoint_embed.weight initialized to 0, query_feat.weight random
        "refpoint_embed": jnp.zeros((num_queries * group_detr, 4), jnp.float32),
        "query_feat": jax.random.normal(
            ks[5], (num_queries * group_detr, hidden_dim), jnp.float32),
    }
    return params


# ----------------------------------------------------------------------------
# Pure-JAX reference (same bf16-operand / f32-accumulate matmul convention)
# ----------------------------------------------------------------------------
def _reference(hs, ref_unsigmoid, p):
    def mm(x, w):
        return jnp.dot(x.astype(jnp.bfloat16), w.astype(jnp.bfloat16),
                       preferred_element_type=jnp.float32)

    h = jnp.maximum(mm(hs, p["w1"]) + p["b1"][0], 0.0)
    h = jnp.maximum(mm(h, p["w2"]) + p["b2"][0], 0.0)
    delta = mm(h, p["w3"]) + p["b3"][0]
    coord = jax.nn.sigmoid(delta + ref_unsigmoid)
    logits = mm(hs, p["wc"]) + p["bc"][0]
    return logits, coord


if __name__ == "__main__":
    key = jax.random.PRNGKey(0)
    # small shapes: L decoder layers, batch, queries, hidden, classes
    L, B, Q, D, C = 2, 2, 8, 32, 8

    k_hs, k_ref, k_p, k_w3, k_b3 = jax.random.split(key, 5)
    hs = jax.random.normal(k_hs, (L, B, Q, D), jnp.float32)
    ref_unsigmoid = jax.random.normal(k_ref, (L, B, Q, 4), jnp.float32)
    params = init_params(k_p, D, C, num_queries=Q)

    # The module's faithful init zeros the last bbox layer; replace it with
    # small random values for the correctness check so the full MLP path is
    # actually exercised (not just sigmoid(ref)).
    params = dict(params)
    params["w3"] = 0.1 * jax.random.normal(k_w3, (D, 4), jnp.float32)
    params["b3"] = 0.1 * jax.random.normal(k_b3, (1, 4), jnp.float32)

    out = lwdetr_head(hs, ref_unsigmoid, params, aux_loss=True)
    jax.block_until_ready(out["pred_logits"])
    jax.block_until_ready(out["pred_boxes"])

    ref_logits, ref_coord = _reference(hs, ref_unsigmoid, params)
    assert jnp.allclose(out["pred_logits"], ref_logits[-1], atol=1e-3, rtol=1e-3)
    assert jnp.allclose(out["pred_boxes"], ref_coord[-1], atol=1e-3, rtol=1e-3)
    assert jnp.allclose(out["aux_outputs"][0]["pred_logits"], ref_logits[0],
                        atol=1e-3, rtol=1e-3)
    assert jnp.allclose(out["aux_outputs"][0]["pred_boxes"], ref_coord[0],
                        atol=1e-3, rtol=1e-3)

    print("KERNEL_OK")
</pallas_src>

<mosaic_0001>
module attributes {stable_mosaic.version = 11 : i64} {
  func.func @kernel(%arg0: i32, %arg1: memref<16x32xbf16, #tpu.memory_space<vmem>>, %arg2: memref<16x4xf32, #tpu.memory_space<vmem>>, %arg3: memref<32x256xbf16, #tpu.memory_space<vmem>>, %arg4: memref<1x256xf32, #tpu.memory_space<vmem>>, %arg5: memref<128x128xbf16, #tpu.memory_space<vmem>>, %arg6: memref<1x128xf32, #tpu.memory_space<vmem>>, %arg7: memref<128x128xbf16, #tpu.memory_space<vmem>>, %arg8: memref<1x128xf32, #tpu.memory_space<vmem>>, %arg9: memref<16x8xf32, #tpu.memory_space<vmem>>, %arg10: memref<16x4xf32, #tpu.memory_space<vmem>>) attributes {dimension_semantics = [#tpu.dimension_semantics<parallel>], iteration_bounds = array<i64: 2>, scalar_prefetch = 0 : i64, scratch_operands = 0 : i64, tpu.core_type = #tpu.core_type<tc>, window_params = [{transform_indices = @transform_0, window_bounds = array<i64: 16, 32>}, {transform_indices = @transform_1, window_bounds = array<i64: 16, 4>}, {pipeline_mode = #tpu.pipeline_mode<synchronous>, transform_indices = @transform_2, window_bounds = array<i64: 32, 256>}, {pipeline_mode = #tpu.pipeline_mode<synchronous>, transform_indices = @transform_3, window_bounds = array<i64: 1, 256>}, {pipeline_mode = #tpu.pipeline_mode<synchronous>, transform_indices = @transform_4, window_bounds = array<i64: 128, 128>}, {pipeline_mode = #tpu.pipeline_mode<synchronous>, transform_indices = @transform_5, window_bounds = array<i64: 1, 128>}, {pipeline_mode = #tpu.pipeline_mode<synchronous>, transform_indices = @transform_6, window_bounds = array<i64: 128, 128>}, {pipeline_mode = #tpu.pipeline_mode<synchronous>, transform_indices = @transform_7, window_bounds = array<i64: 1, 128>}, {transform_indices = @transform_8, window_bounds = array<i64: 16, 8>}, {transform_indices = @transform_9, window_bounds = array<i64: 16, 4>}]} {
    %c0 = arith.constant 0 : index
    %c0_0 = arith.constant 0 : index
    %0 = vector.load %arg1[%c0, %c0_0] : memref<16x32xbf16, #tpu.memory_space<vmem>>, vector<16x32xbf16>
    %c0_1 = arith.constant 0 : index
    %c0_2 = arith.constant 0 : index
    %1 = vector.load %arg3[%c0_1, %c0_2] : memref<32x256xbf16, #tpu.memory_space<vmem>>, vector<32x256xbf16>
    %cst = arith.constant dense<0.000000e+00> : vector<16x256xf32>
    %2 = tpu.matmul %0, %1, %cst {dimension_numbers = #tpu.dot_dimension_numbers<[1], [0], [0], [1], [0, 0, 1, 1], [], []>} : vector<16x32xbf16>, vector<32x256xbf16>, vector<16x256xf32> -> vector<16x256xf32>
    %c0_3 = arith.constant 0 : index
    %c0_4 = arith.constant 0 : index
    %3 = vector.load %arg4[%c0_3, %c0_4] : memref<1x256xf32, #tpu.memory_space<vmem>>, vector<1x256xf32>
    %4 = vector.broadcast %3 : vector<1x256xf32> to vector<16x256xf32>
    %5 = arith.addf %2, %4 : vector<16x256xf32>
    %6 = vector.extract_strided_slice %5 {offsets = [0, 0], sizes = [16, 128], strides = [1, 1]} : vector<16x256xf32> to vector<16x128xf32>
    %cst_5 = arith.constant 0.000000e+00 : f32
    %7 = vector.broadcast %cst_5 : f32 to vector<16x128xf32>
    %8 = arith.maximumf %6, %7 : vector<16x128xf32>
    %9 = vector.extract_strided_slice %5 {offsets = [0, 128], sizes = [16, 8], strides = [1, 1]} : vector<16x256xf32> to vector<16x8xf32>
    %10 = arith.truncf %8 : vector<16x128xf32> to vector<16x128xbf16>
    %c0_6 = arith.constant 0 : index
    %c0_7 = arith.constant 0 : index
    %11 = vector.load %arg5[%c0_6, %c0_7] : memref<128x128xbf16, #tpu.memory_space<vmem>>, vector<128x128xbf16>
    %cst_8 = arith.constant dense<0.000000e+00> : vector<16x128xf32>
    %12 = tpu.matmul %10, %11, %cst_8 {dimension_numbers = #tpu.dot_dimension_numbers<[1], [0], [0], [1], [0, 0, 1, 1], [], []>} : vector<16x128xbf16>, vector<128x128xbf16>, vector<16x128xf32> -> vector<16x128xf32>
    %c0_9 = arith.constant 0 : index
    %c0_10 = arith.constant 0 : index
    %13 = vector.load %arg6[%c0_9, %c0_10] : memref<1x128xf32, #tpu.memory_space<vmem>>, vector<1x128xf32>
    %14 = vector.broadcast %13 : vector<1x128xf32> to vector<16x128xf32>
    %15 = arith.addf %12, %14 : vector<16x128xf32>
    %cst_11 = arith.constant 0.000000e+00 : f32
    %16 = vector.broadcast %cst_11 : f32 to vector<16x128xf32>
    %17 = arith.maximumf %15, %16 : vector<16x128xf32>
    %18 = arith.truncf %17 : vector<16x128xf32> to vector<16x128xbf16>
    %c0_12 = arith.constant 0 : index
    %c0_13 = arith.constant 0 : index
    %19 = vector.load %arg7[%c0_12, %c0_13] : memref<128x128xbf16, #tpu.memory_space<vmem>>, vector<128x128xbf16>
    %cst_14 = arith.constant dense<0.000000e+00> : vector<16x128xf32>
    %20 = tpu.matmul %18, %19, %cst_14 {dimension_numbers = #tpu.dot_dimension_numbers<[1], [0], [0], [1], [0, 0, 1, 1], [], []>} : vector<16x128xbf16>, vector<128x128xbf16>, vector<16x128xf32> -> vector<16x128xf32>
    %c0_15 = arith.constant 0 : index
    %c0_16 = arith.constant 0 : index
    %21 = vector.load %arg8[%c0_15, %c0_16] : memref<1x128xf32, #tpu.memory_space<vmem>>, vector<1x128xf32>
    %22 = vector.broadcast %21 : vector<1x128xf32> to vector<16x128xf32>
    %23 = arith.addf %20, %22 : vector<16x128xf32>
    %24 = vector.extract_strided_slice %23 {offsets = [0, 0], sizes = [16, 4], strides = [1, 1]} : vector<16x128xf32> to vector<16x4xf32>
    %c0_17 = arith.constant 0 : index
    %c0_18 = arith.constant 0 : index
    %25 = vector.load %arg2[%c0_17, %c0_18] : memref<16x4xf32, #tpu.memory_space<vmem>>, vector<16x4xf32>
    %26 = arith.addf %24, %25 : vector<16x4xf32>
    %27 = arith.negf %26 : vector<16x4xf32>
    %28 = math.exp %27 : vector<16x4xf32>
    %cst_19 = arith.constant 1.000000e+00 : f32
    %29 = vector.broadcast %cst_19 : f32 to vector<16x4xf32>
    %30 = arith.addf %29, %28 : vector<16x4xf32>
    %31 = arith.divf %29, %30 : vector<16x4xf32>
    %c0_20 = arith.constant 0 : index
    %c0_21 = arith.constant 0 : index
    %32 = vector.load %arg9[%c0_20, %c0_21] : memref<16x8xf32, #tpu.memory_space<vmem>>, vector<16x8xf32>
    tpu.vector_store %arg9[%c0_20, %c0_21], %9 {strides = array<i32>} : memref<16x8xf32, #tpu.memory_space<vmem>>, vector<16x8xf32>,
    %c0_22 = arith.constant 0 : index
    %c0_23 = arith.constant 0 : index
    %33 = vector.load %arg10[%c0_22, %c0_23] : memref<16x4xf32, #tpu.memory_space<vmem>>, vector<16x4xf32>
    tpu.vector_store %arg10[%c0_22, %c0_23], %31 {strides = array<i32>} : memref<16x4xf32, #tpu.memory_space<vmem>>, vector<16x4xf32>,
    return
  }
  func.func @transform_0(%arg0: i32) -> (i32, i32) {
    %c0_i32 = arith.constant 0 : i32
    %c0_i32_0 = arith.constant 0 : i32
    return %arg0, %c0_i32 : i32, i32
  }
  func.func @transform_1(%arg0: i32) -> (i32, i32) {
    %c0_i32 = arith.constant 0 : i32
    %c0_i32_0 = arith.constant 0 : i32
    return %arg0, %c0_i32 : i32, i32
  }
  func.func @transform_2(%arg0: i32) -> (i32, i32) {
    %c0_i32 = arith.constant 0 : i32
    %c0_i32_0 = arith.constant 0 : i32
    %c0_i32_1 = arith.constant 0 : i32
    return %c0_i32, %c0_i32_0 : i32, i32
  }
  func.func @transform_3(%arg0: i32) -> (i32, i32) {
    %c0_i32 = arith.constant 0 : i32
    %c0_i32_0 = arith.constant 0 : i32
    %c0_i32_1 = arith.constant 0 : i32
    return %c0_i32, %c0_i32_0 : i32, i32
  }
  func.func @transform_4(%arg0: i32) -> (i32, i32) {
    %c0_i32 = arith.constant 0 : i32
    %c0_i32_0 = arith.constant 0 : i32
    %c0_i32_1 = arith.constant 0 : i32
    return %c0_i32, %c0_i32_0 : i32, i32
  }
  func.func @transform_5(%arg0: i32) -> (i32, i32) {
    %c0_i32 = arith.constant 0 : i32
    %c0_i32_0 = arith.constant 0 : i32
    %c0_i32_1 = arith.constant 0 : i32
    return %c0_i32, %c0_i32_0 : i32, i32
  }
  func.func @transform_6(%arg0: i32) -> (i32, i32) {
    %c0_i32 = arith.constant 0 : i32
    %c0_i32_0 = arith.constant 0 : i32
    %c0_i32_1 = arith.constant 0 : i32
    return %c0_i32, %c0_i32_0 : i32, i32
  }
  func.func @transform_7(%arg0: i32) -> (i32, i32) {
    %c0_i32 = arith.constant 0 : i32
    %c0_i32_0 = arith.constant 0 : i32
    %c0_i32_1 = arith.constant 0 : i32
    return %c0_i32, %c0_i32_0 : i32, i32
  }
  func.func @transform_8(%arg0: i32) -> (i32, i32) {
    %c0_i32 = arith.constant 0 : i32
    %c0_i32_0 = arith.constant 0 : i32
    return %arg0, %c0_i32 : i32, i32
  }
  func.func @transform_9(%arg0: i32) -> (i32, i32) {
    %c0_i32 = arith.constant 0 : i32
    %c0_i32_0 = arith.constant 0 : i32
    return %arg0, %c0_i32 : i32, i32
  }
}

module attributes {stable_mosaic.version = 11 : i64} {
  func.func @kernel(%arg0: i32, %arg1: memref<16x32xbf16, #tpu.memory_space<vmem>>, %arg2: memref<16x4xf32, #tpu.memory_space<vmem>>, %arg3: memref<32x256xbf16, #tpu.memory_space<vmem>>, %arg4: memref<1x256xf32, #tpu.memory_space<vmem>>, %arg5: memref<128x128xbf16, #tpu.memory_space<vmem>>, %arg6: memref<1x128xf32, #tpu.memory_space<vmem>>, %arg7: memref<128x128xbf16, #tpu.memory_space<vmem>>, %arg8: memref<1x128xf32, #tpu.memory_space<vmem>>, %arg9: memref<16x8xf32, #tpu.memory_space<vmem>>, %arg10: memref<16x4xf32, #tpu.memory_space<vmem>>) attributes {dimension_semantics = [#tpu.dimension_semantics<parallel>], iteration_bounds = array<i64: 2>, scalar_prefetch = 0 : i64, scratch_operands = 0 : i64, tpu.core_type = #tpu.core_type<tc>, window_params = [{transform_indices = @transform_0, window_bounds = array<i64: 16, 32>}, {transform_indices = @transform_1, window_bounds = array<i64: 16, 4>}, {pipeline_mode = #tpu.pipeline_mode<synchronous>, transform_indices = @transform_2, window_bounds = array<i64: 32, 256>}, {pipeline_mode = #tpu.pipeline_mode<synchronous>, transform_indices = @transform_3, window_bounds = array<i64: 1, 256>}, {pipeline_mode = #tpu.pipeline_mode<synchronous>, transform_indices = @transform_4, window_bounds = array<i64: 128, 128>}, {pipeline_mode = #tpu.pipeline_mode<synchronous>, transform_indices = @transform_5, window_bounds = array<i64: 1, 128>}, {pipeline_mode = #tpu.pipeline_mode<synchronous>, transform_indices = @transform_6, window_bounds = array<i64: 128, 128>}, {pipeline_mode = #tpu.pipeline_mode<synchronous>, transform_indices = @transform_7, window_bounds = array<i64: 1, 128>}, {transform_indices = @transform_8, window_bounds = array<i64: 16, 8>}, {transform_indices = @transform_9, window_bounds = array<i64: 16, 4>}]} {
    %c0 = arith.constant 0 : index
    %c0_0 = arith.constant 0 : index
    %0 = vector.load %arg1[%c0, %c0_0] : memref<16x32xbf16, #tpu.memory_space<vmem>>, vector<16x32xbf16>
    %c0_1 = arith.constant 0 : index
    %c0_2 = arith.constant 0 : index
    %1 = vector.load %arg3[%c0_1, %c0_2] : memref<32x256xbf16, #tpu.memory_space<vmem>>, vector<32x256xbf16>
    %cst = arith.constant dense<0.000000e+00> : vector<16x256xf32>
    %2 = tpu.matmul %0, %1, %cst {dimension_numbers = #tpu.dot_dimension_numbers<[1], [0], [0], [1], [0, 0, 1, 1], [], []>} : vector<16x32xbf16>, vector<32x256xbf16>, vector<16x256xf32> -> vector<16x256xf32>
    %c0_3 = arith.constant 0 : index
    %c0_4 = arith.constant 0 : index
    %3 = vector.load %arg4[%c0_3, %c0_4] : memref<1x256xf32, #tpu.memory_space<vmem>>, vector<1x256xf32>
    %4 = vector.broadcast %3 : vector<1x256xf32> to vector<16x256xf32>
    %5 = arith.addf %2, %4 : vector<16x256xf32>
    %6 = vector.extract_strided_slice %5 {offsets = [0, 0], sizes = [16, 128], strides = [1, 1]} : vector<16x256xf32> to vector<16x128xf32>
    %cst_5 = arith.constant 0.000000e+00 : f32
    %7 = vector.broadcast %cst_5 : f32 to vector<16x128xf32>
    %8 = arith.maximumf %6, %7 : vector<16x128xf32>
    %9 = vector.extract_strided_slice %5 {offsets = [0, 128], sizes = [16, 8], strides = [1, 1]} : vector<16x256xf32> to vector<16x8xf32>
    %10 = arith.truncf %8 : vector<16x128xf32> to vector<16x128xbf16>
    %c0_6 = arith.constant 0 : index
    %c0_7 = arith.constant 0 : index
    %11 = vector.load %arg5[%c0_6, %c0_7] : memref<128x128xbf16, #tpu.memory_space<vmem>>, vector<128x128xbf16>
    %cst_8 = arith.constant dense<0.000000e+00> : vector<16x128xf32>
    %12 = tpu.matmul %10, %11, %cst_8 {dimension_numbers = #tpu.dot_dimension_numbers<[1], [0], [0], [1], [0, 0, 1, 1], [], []>} : vector<16x128xbf16>, vector<128x128xbf16>, vector<16x128xf32> -> vector<16x128xf32>
    %c0_9 = arith.constant 0 : index
    %c0_10 = arith.constant 0 : index
    %13 = vector.load %arg6[%c0_9, %c0_10] : memref<1x128xf32, #tpu.memory_space<vmem>>, vector<1x128xf32>
    %14 = vector.broadcast %13 : vector<1x128xf32> to vector<16x128xf32>
    %15 = arith.addf %12, %14 : vector<16x128xf32>
    %cst_11 = arith.constant 0.000000e+00 : f32
    %16 = vector.broadcast %cst_11 : f32 to vector<16x128xf32>
    %17 = arith.maximumf %15, %16 : vector<16x128xf32>
    %18 = arith.truncf %17 : vector<16x128xf32> to vector<16x128xbf16>
    %c0_12 = arith.constant 0 : index
    %c0_13 = arith.constant 0 : index
    %19 = vector.load %arg7[%c0_12, %c0_13] : memref<128x128xbf16, #tpu.memory_space<vmem>>, vector<128x128xbf16>
    %cst_14 = arith.constant dense<0.000000e+00> : vector<16x128xf32>
    %20 = tpu.matmul %18, %19, %cst_14 {dimension_numbers = #tpu.dot_dimension_numbers<[1], [0], [0], [1], [0, 0, 1, 1], [], []>} : vector<16x128xbf16>, vector<128x128xbf16>, vector<16x128xf32> -> vector<16x128xf32>
    %c0_15 = arith.constant 0 : index
    %c0_16 = arith.constant 0 : index
    %21 = vector.load %arg8[%c0_15, %c0_16] : memref<1x128xf32, #tpu.memory_space<vmem>>, vector<1x128xf32>
    %22 = vector.broadcast %21 : vector<1x128xf32> to vector<16x128xf32>
    %23 = arith.addf %20, %22 : vector<16x128xf32>
    %24 = vector.extract_strided_slice %23 {offsets = [0, 0], sizes = [16, 4], strides = [1, 1]} : vector<16x128xf32> to vector<16x4xf32>
    %c0_17 = arith.constant 0 : index
    %c0_18 = arith.constant 0 : index
    %25 = vector.load %arg2[%c0_17, %c0_18] : memref<16x4xf32, #tpu.memory_space<vmem>>, vector<16x4xf32>
    %26 = arith.addf %24, %25 : vector<16x4xf32>
    %27 = arith.negf %26 : vector<16x4xf32>
    %28 = math.exp %27 : vector<16x4xf32>
    %cst_19 = arith.constant 1.000000e+00 : f32
    %29 = vector.broadcast %cst_19 : f32 to vector<16x4xf32>
    %30 = arith.addf %29, %28 : vector<16x4xf32>
    %31 = arith.divf %29, %30 : vector<16x4xf32>
    %c0_20 = arith.constant 0 : index
    %c0_21 = arith.constant 0 : index
    %32 = vector.load %arg9[%c0_20, %c0_21] : memref<16x8xf32, #tpu.memory_space<vmem>>, vector<16x8xf32>
    tpu.vector_store %arg9[%c0_20, %c0_21], %9 {strides = array<i32>} : memref<16x8xf32, #tpu.memory_space<vmem>>, vector<16x8xf32>,
    %c0_22 = arith.constant 0 : index
    %c0_23 = arith.constant 0 : index
    %33 = vector.load %arg10[%c0_22, %c0_23] : memref<16x4xf32, #tpu.memory_space<vmem>>, vector<16x4xf32>
    tpu.vector_store %arg10[%c0_22, %c0_23], %31 {strides = array<i32>} : memref<16x4xf32, #tpu.memory_space<vmem>>, vector<16x4xf32>,
    return
  }
  func.func @transform_0(%arg0: i32) -> (i32, i32) {
    %c0_i32 = arith.constant 0 : i32
    %c0_i32_0 = arith.constant 0 : i32
    return %arg0, %c0_i32 : i32, i32
  }
  func.func @transform_1(%arg0: i32) -> (i32, i32) {
    %c0_i32 = arith.constant 0 : i32
    %c0_i32_0 = arith.constant 0 : i32
    return %arg0, %c0_i32 : i32, i32
  }
  func.func @transform_2(%arg0: i32) -> (i32, i32) {
    %c0_i32 = arith.constant 0 : i32
    %c0_i32_0 = arith.constant 0 : i32
    %c0_i32_1 = arith.constant 0 : i32
    return %c0_i32, %c0_i32_0 : i32, i32
  }
  func.func @transform_3(%arg0: i32) -> (i32, i32) {
    %c0_i32 = arith.constant 0 : i32
    %c0_i32_0 = arith.constant 0 : i32
    %c0_i32_1 = arith.constant 0 : i32
    return %c0_i32, %c0_i32_0 : i32, i32
  }
  func.func @transform_4(%arg0: i32) -> (i32, i32) {
    %c0_i32 = arith.constant 0 : i32
    %c0_i32_0 = arith.constant 0 : i32
    %c0_i32_1 = arith.constant 0 : i32
    return %c0_i32, %c0_i32_0 : i32, i32
  }
  func.func @transform_5(%arg0: i32) -> (i32, i32) {
    %c0_i32 = arith.constant 0 : i32
    %c0_i32_0 = arith.constant 0 : i32
    %c0_i32_1 = arith.constant 0 : i32
    return %c0_i32, %c0_i32_0 : i32, i32
  }
  func.func @transform_6(%arg0: i32) -> (i32, i32) {
    %c0_i32 = arith.constant 0 : i32
    %c0_i32_0 = arith.constant 0 : i32
    %c0_i32_1 = arith.constant 0 : i32
    return %c0_i32, %c0_i32_0 : i32, i32
  }
  func.func @transform_7(%arg0: i32) -> (i32, i32) {
    %c0_i32 = arith.constant 0 : i32
    %c0_i32_0 = arith.constant 0 : i32
    %c0_i32_1 = arith.constant 0 : i32
    return %c0_i32, %c0_i32_0 : i32, i32
  }
  func.func @transform_8(%arg0: i32) -> (i32, i32) {
    %c0_i32 = arith.constant 0 : i32
    %c0_i32_0 = arith.constant 0 : i32
    return %arg0, %c0_i32 : i32, i32
  }
  func.func @transform_9(%arg0: i32) -> (i32, i32) {
    %c0_i32 = arith.constant 0 : i32
    %c0_i32_0 = arith.constant 0 : i32
    return %arg0, %c0_i32 : i32, i32
  }
}

</mosaic_0001>

<llo_original>
// kernel: tpu_custom_call.1
$region0: #{tpu_custom_call.1}
  #allocation0 [shape = 'u32[]', space=smem, size = 0x4, offset = 0x4, fixed_abs, tag = 'smem constant byte address 0x4 - core index']
  #allocation1 [shape = 'u32[144,128]{1,0:T(1,128)}', space=vmem, size = 0x12000, scoped, tag = 'internal scratch']
  %s0 = inlined_call_operand.hbm [shape: bf16[32,32], index: 0, kind: input, shape index: {}]
  %s1 = inlined_call_operand.hbm [shape: f32[32,4], index: 1, kind: input, shape index: {}]
  %s2 = inlined_call_operand.hbm [shape: bf16[32,256], index: 2, kind: input, shape index: {}]
  %s3 = inlined_call_operand.hbm [shape: f32[1,256], index: 3, kind: input, shape index: {}]
  %s4 = inlined_call_operand.hbm [shape: bf16[128,128], index: 4, kind: input, shape index: {}]
  %s5 = inlined_call_operand.hbm [shape: f32[1,128], index: 5, kind: input, shape index: {}]
  %s6 = inlined_call_operand.hbm [shape: bf16[128,128], index: 6, kind: input, shape index: {}]
  %s7 = inlined_call_operand.hbm [shape: f32[1,128], index: 7, kind: input, shape index: {}]
  %s8 = inlined_call_operand.hbm [shape: f32[32,8], index: 8, kind: output, shape index: {0}]
  %s9 = inlined_call_operand.hbm [shape: f32[32,4], index: 9, kind: output, shape index: {1}]
  %10 = xla_tuple %s8, %s9
  %s11 = sld [smem:[#allocation0]]
  $region105: #{tpu_custom_call.1} parent=0
    _
  %s13 = ssub.s32 1, %s11
  %s14 = scalar_select 0, %s13, %s11
  $region1: #{tpu_custom_call.1} parent=0
    #allocation2 [shape = 'u8[8192]{0}', space=vmem, size = 0x2000, scoped, tag = 'input window, operand 0']
    #allocation3 [shape = 's32[2]{0}', space=sflag, size = 0x8, scoped, tag = 'scoped memory for tpu_custom_call.1']
    #allocation4 [shape = 's32[2]{0}', space=sflag, size = 0x8, scoped, tag = 'scoped memory for tpu_custom_call.1']
    #allocation5 [shape = 'u8[16384]{0}', space=vmem, size = 0x4000, scoped, tag = 'input window, operand 1']
    #allocation6 [shape = 's32[2]{0}', space=sflag, size = 0x8, scoped, tag = 'scoped memory for tpu_custom_call.1']
    #allocation7 [shape = 'u8[16384]{0}', space=vmem, size = 0x4000, scoped, tag = 'input window, operand 2, single buffered']
    #allocation8 [shape = 'u8[1024]{0}', space=vmem, size = 0x400, scoped, tag = 'input window, operand 3, single buffered']
    #allocation9 [shape = 's32[1]{0}', space=sflag, size = 0x4, scoped, tag = 'scoped memory for tpu_custom_call.1']
    #allocation10 [shape = 'u8[32768]{0}', space=vmem, size = 0x8000, scoped, tag = 'input window, operand 4, single buffered']
    #allocation11 [shape = 'u8[512]{0}', space=vmem, size = 0x400, scoped, tag = 'input window, operand 5, single buffered']
    #allocation12 [shape = 's32[1]{0}', space=sflag, size = 0x4, scoped, tag = 'scoped memory for tpu_custom_call.1']
    #allocation13 [shape = 'u8[32768]{0}', space=vmem, size = 0x8000, scoped, tag = 'input window, operand 6, single buffered']
    #allocation14 [shape = 'u8[512]{0}', space=vmem, size = 0x400, scoped, tag = 'input window, operand 7, single buffered']
    #allocation15 [shape = 's32[1]{0}', space=sflag, size = 0x4, scoped, tag = 'scoped memory for tpu_custom_call.1']
    #allocation16 [shape = 'u8[16384]{0}', space=vmem, size = 0x4000, scoped, tag = 'output window, operand 0']
    #allocation17 [shape = 'u8[16384]{0}', space=vmem, size = 0x4000, scoped, tag = 'output window, operand 1']
    #allocation18 [shape = 's32[2]{0}', space=sflag, size = 0x8, scoped, tag = 'scoped memory for tpu_custom_call.1']
    %15 = vsyncpa [#allocation3], 0
    %s16 = scalar_lea.sflag [#allocation3], 1
    %17 = vsyncpa %s16, 0
    %18 = vsyncpa [#allocation6], 0
    %s19 = scalar_lea.sflag [#allocation6], 1
    %20 = vsyncpa %s19, 0
    %21 = vsyncpa [#allocation9], 0
    %22 = vsyncpa [#allocation12], 0
    %23 = vsyncpa [#allocation15], 0
    %24 = vsyncpa [#allocation4], 0
    %s25 = scalar_lea.sflag [#allocation4], 1
    %26 = vsyncpa %s25, 0
    %27 = vsyncpa [#allocation18], 0
    %s28 = scalar_lea.sflag [#allocation18], 1
    %29 = vsyncpa %s28, 0
    loop: start=0, step=1, limit=4
    $region2: #{tpu_custom_call.1} parent=1 // loop_pre_header
      _
    $region3: #{tpu_custom_call.1} parent=1 // loop_header
      %s31 = sphi 0, %s35
      %p32 = scmp.ge.s32.totalorder %s31, 4
      %s41 = sphi 0, %s43
      %s44 = sphi 0, %s41
      %s45 = sphi 0, %s44
      %s61 = sphi 0, %s45
      %s67 = sphi 0, %s69
      %s70 = sphi 0, %s67
      %s71 = sphi 0, %s70
      %s87 = sphi 0, %s71
      %s91 = sphi 0, %s91
      %s93 = sphi 0, %s91
      %s94 = sphi 0, %s93
      %s108 = sphi 0, %s94
      %s112 = sphi 0, %s112
      %s114 = sphi 0, %s112
      %s115 = sphi 0, %s114
      %s129 = sphi 0, %s115
      %s133 = sphi 0, %s133
      %s135 = sphi 0, %s133
      %s136 = sphi 0, %s135
      %s150 = sphi 0, %s136
      %s154 = sphi 0, %s154
      %s156 = sphi 0, %s154
      %s157 = sphi 0, %s156
      %s171 = sphi 0, %s157
      %s175 = sphi 0, %s175
      %s177 = sphi 0, %s175
      %s178 = sphi 0, %s177
      %s192 = sphi 0, %s178
      %s196 = sphi 0, %s196
      %s198 = sphi 0, %s196
      %s199 = sphi 0, %s198
      %s213 = sphi 0, %s199
      %s219 = sphi 0, %s221
      %s222 = sphi 0, %s219
      %s223 = sphi 0, %s222
      %s239 = sphi 0, %s223
      %s245 = sphi 0, %s247
      %s248 = sphi 0, %s245
      %s249 = sphi 0, %s248
      %s265 = sphi 0, %s249
    $region4: #{tpu_custom_call.1} parent=1 // loop_header_branch
      %34 = sbr.rel (%p32) target = $region8
    $region5: #{tpu_custom_call.1} parent=1 // loop_body
      %s36 = ssub.s32 %s31, 1
      %s37 = ssub.s32 %s31, 2
      %s38 = sadd.s32 %s31, 1
      %s39 = ssub.s32 %s31, %s38
      %p40 = scmp.eq.s32.totalorder %s39, 0
      %s42 = sadd.s32 %s41, 1
      %s43 = scalar_select %p40, %s41, %s42
      %p46 = pneg %p40
      %p47 = scmp.eq.s32.totalorder %s31, 1
      %p48 = por %p46, %p47
      %p49 = scmp.ne.s32.totalorder %s41, %s44
      %p50 = scmp.eq.s32.totalorder %s31, 0
      %p51 = por %p49, %p50
      %p52 = scmp.ne.s32.totalorder %s41, %s44
      %p53 = scmp.eq.s32.totalorder %s36, 1
      %p54 = por %p52, %p53
      %p55 = scmp.ne.s32.totalorder %s44, %s45
      %p56 = scmp.eq.s32.totalorder %s36, 0
      %p57 = por %p55, %p56
      %p58 = scmp.ne.s32.totalorder %s44, %s45
      %p59 = scmp.eq.s32.totalorder %s37, 1
      %p60 = por %p58, %p59
      %p62 = scmp.ne.s32.totalorder %s45, %s61
      %p63 = scmp.eq.s32.totalorder %s37, 0
      %p64 = por %p62, %p63
      %s65 = ssub.s32 %s31, %s38
      %p66 = scmp.eq.s32.totalorder %s65, 0
      %s68 = sadd.s32 %s67, 1
      %s69 = scalar_select %p66, %s67, %s68
      %p72 = pneg %p66
      %p73 = scmp.eq.s32.totalorder %s31, 1
      %p74 = por %p72, %p73
      %p75 = scmp.ne.s32.totalorder %s67, %s70
      %p76 = scmp.eq.s32.totalorder %s31, 0
      %p77 = por %p75, %p76
      %p78 = scmp.ne.s32.totalorder %s67, %s70
      %p79 = scmp.eq.s32.totalorder %s36, 1
      %p80 = por %p78, %p79
      %p81 = scmp.ne.s32.totalorder %s70, %s71
      %p82 = scmp.eq.s32.totalorder %s36, 0
      %p83 = por %p81, %p82
      %p84 = scmp.ne.s32.totalorder %s70, %s71
      %p85 = scmp.eq.s32.totalorder %s37, 1
      %p86 = por %p84, %p85
      %p88 = scmp.ne.s32.totalorder %s71, %s87
      %p89 = scmp.eq.s32.totalorder %s37, 0
      %p90 = por %p88, %p89
      %s92 = sadd.s32 %s91, 1
      %p95 = scmp.eq.s32.totalorder %s31, 1
      %p96 = scmp.ne.s32.totalorder %s91, %s93
      %p97 = scmp.eq.s32.totalorder %s31, 0
      %p98 = por %p96, %p97
      %p99 = scmp.ne.s32.totalorder %s91, %s93
      %p100 = scmp.eq.s32.totalorder %s36, 1
      %p101 = por %p99, %p100
      %p102 = scmp.ne.s32.totalorder %s93, %s94
      %p103 = scmp.eq.s32.totalorder %s36, 0
      %p104 = por %p102, %p103
      %p105 = scmp.ne.s32.totalorder %s93, %s94
      %p106 = scmp.eq.s32.totalorder %s37, 1
      %p107 = por %p105, %p106
      %p109 = scmp.ne.s32.totalorder %s94, %s108
      %p110 = scmp.eq.s32.totalorder %s37, 0
      %p111 = por %p109, %p110
      %s113 = sadd.s32 %s112, 1
      %p116 = scmp.eq.s32.totalorder %s31, 1
      %p117 = scmp.ne.s32.totalorder %s112, %s114
      %p118 = scmp.eq.s32.totalorder %s31, 0
      %p119 = por %p117, %p118
      %p120 = scmp.ne.s32.totalorder %s112, %s114
      %p121 = scmp.eq.s32.totalorder %s36, 1
      %p122 = por %p120, %p121
      %p123 = scmp.ne.s32.totalorder %s114, %s115
      %p124 = scmp.eq.s32.totalorder %s36, 0
      %p125 = por %p123, %p124
      %p126 = scmp.ne.s32.totalorder %s114, %s115
      %p127 = scmp.eq.s32.totalorder %s37, 1
      %p128 = por %p126, %p127
      %p130 = scmp.ne.s32.totalorder %s115, %s129
      %p131 = scmp.eq.s32.totalorder %s37, 0
      %p132 = por %p130, %p131
      %s134 = sadd.s32 %s133, 1
      %p137 = scmp.eq.s32.totalorder %s31, 1
      %p138 = scmp.ne.s32.totalorder %s133, %s135
      %p139 = scmp.eq.s32.totalorder %s31, 0
      %p140 = por %p138, %p139
      %p141 = scmp.ne.s32.totalorder %s133, %s135
      %p142 = scmp.eq.s32.totalorder %s36, 1
      %p143 = por %p141, %p142
      %p144 = scmp.ne.s32.totalorder %s135, %s136
      %p145 = scmp.eq.s32.totalorder %s36, 0
      %p146 = por %p144, %p145
      %p147 = scmp.ne.s32.totalorder %s135, %s136
      %p148 = scmp.eq.s32.totalorder %s37, 1
      %p149 = por %p147, %p148
      %p151 = scmp.ne.s32.totalorder %s136, %s150
      %p152 = scmp.eq.s32.totalorder %s37, 0
      %p153 = por %p151, %p152
      %s155 = sadd.s32 %s154, 1
      %p158 = scmp.eq.s32.totalorder %s31, 1
      %p159 = scmp.ne.s32.totalorder %s154, %s156
      %p160 = scmp.eq.s32.totalorder %s31, 0
      %p161 = por %p159, %p160
      %p162 = scmp.ne.s32.totalorder %s154, %s156
      %p163 = scmp.eq.s32.totalorder %s36, 1
      %p164 = por %p162, %p163
      %p165 = scmp.ne.s32.totalorder %s156, %s157
      %p166 = scmp.eq.s32.totalorder %s36, 0
      %p167 = por %p165, %p166
      %p168 = scmp.ne.s32.totalorder %s156, %s157
      %p169 = scmp.eq.s32.totalorder %s37, 1
      %p170 = por %p168, %p169
      %p172 = scmp.ne.s32.totalorder %s157, %s171
      %p173 = scmp.eq.s32.totalorder %s37, 0
      %p174 = por %p172, %p173
      %s176 = sadd.s32 %s175, 1
      %p179 = scmp.eq.s32.totalorder %s31, 1
      %p180 = scmp.ne.s32.totalorder %s175, %s177
      %p181 = scmp.eq.s32.totalorder %s31, 0
      %p182 = por %p180, %p181
      %p183 = scmp.ne.s32.totalorder %s175, %s177
      %p184 = scmp.eq.s32.totalorder %s36, 1
      %p185 = por %p183, %p184
      %p186 = scmp.ne.s32.totalorder %s177, %s178
      %p187 = scmp.eq.s32.totalorder %s36, 0
      %p188 = por %p186, %p187
      %p189 = scmp.ne.s32.totalorder %s177, %s178
      %p190 = scmp.eq.s32.totalorder %s37, 1
      %p191 = por %p189, %p190
      %p193 = scmp.ne.s32.totalorder %s178, %s192
      %p194 = scmp.eq.s32.totalorder %s37, 0
      %p195 = por %p193, %p194
      %s197 = sadd.s32 %s196, 1
      %p200 = scmp.eq.s32.totalorder %s31, 1
      %p201 = scmp.ne.s32.totalorder %s196, %s198
      %p202 = scmp.eq.s32.totalorder %s31, 0
      %p203 = por %p201, %p202
      %p204 = scmp.ne.s32.totalorder %s196, %s198
      %p205 = scmp.eq.s32.totalorder %s36, 1
      %p206 = por %p204, %p205
      %p207 = scmp.ne.s32.totalorder %s198, %s199
      %p208 = scmp.eq.s32.totalorder %s36, 0
      %p209 = por %p207, %p208
      %p210 = scmp.ne.s32.totalorder %s198, %s199
      %p211 = scmp.eq.s32.totalorder %s37, 1
      %p212 = por %p210, %p211
      %p214 = scmp.ne.s32.totalorder %s199, %s213
      %p215 = scmp.eq.s32.totalorder %s37, 0
      %p216 = por %p214, %p215
      %s217 = ssub.s32 %s31, %s38
      %p218 = scmp.eq.s32.totalorder %s217, 0
      %s220 = sadd.s32 %s219, 1
      %s221 = scalar_select %p218, %s219, %s220
      %p224 = pneg %p218
      %p225 = scmp.eq.s32.totalorder %s31, 1
      %p226 = por %p224, %p225
      %p227 = scmp.ne.s32.totalorder %s219, %s222
      %p228 = scmp.eq.s32.totalorder %s31, 0
      %p229 = por %p227, %p228
      %p230 = scmp.ne.s32.totalorder %s219, %s222
      %p231 = scmp.eq.s32.totalorder %s36, 1
      %p232 = por %p230, %p231
      %p233 = scmp.ne.s32.totalorder %s222, %s223
      %p234 = scmp.eq.s32.totalorder %s36, 0
      %p235 = por %p233, %p234
      %p236 = scmp.ne.s32.totalorder %s222, %s223
      %p237 = scmp.eq.s32.totalorder %s37, 1
      %p238 = por %p236, %p237
      %p240 = scmp.ne.s32.totalorder %s223, %s239
      %p241 = scmp.eq.s32.totalorder %s37, 0
      %p242 = por %p240, %p241
      %s243 = ssub.s32 %s31, %s38
      %p244 = scmp.eq.s32.totalorder %s243, 0
      %s246 = sadd.s32 %s245, 1
      %s247 = scalar_select %p244, %s245, %s246
      %p250 = pneg %p244
      %p251 = scmp.eq.s32.totalorder %s31, 1
      %p252 = por %p250, %p251
      %p253 = scmp.ne.s32.totalorder %s245, %s248
      %p254 = scmp.eq.s32.totalorder %s31, 0
      %p255 = por %p253, %p254
      %p256 = scmp.ne.s32.totalorder %s245, %s248
      %p257 = scmp.eq.s32.totalorder %s36, 1
      %p258 = por %p256, %p257
      %p259 = scmp.ne.s32.totalorder %s248, %s249
      %p260 = scmp.eq.s32.totalorder %s36, 0
      %p261 = por %p259, %p260
      %p262 = scmp.ne.s32.totalorder %s248, %s249
      %p263 = scmp.eq.s32.totalorder %s37, 1
      %p264 = por %p262, %p263
      %p266 = scmp.ne.s32.totalorder %s249, %s265
      %p267 = scmp.eq.s32.totalorder %s37, 0
      %p268 = por %p266, %p267
      %p269 = scmp.le.s32.totalorder 1, %s31
      %p270 = scmp.lt.s32.totalorder %s31, 3
      %p271 = pnand %p269, %p270
      %p272 = pneg %p271
      // Predicated region
      $region9: #{tpu_custom_call.1} parent=5 // pred_check
        _
      $region10: #{tpu_custom_call.1} parent=5 // pred_check_branch
        %274 = sbr.rel (%p271) target = $region12
      $region11: #{tpu_custom_call.1} parent=5 // pred_region
        %s275 = ssub.s32 %s31, 1
        // Predicated region
        $region13: #{tpu_custom_call.1} parent=11 // pred_check
          %p276 = pneg %p104
        $region14: #{tpu_custom_call.1} parent=11 // pred_check_branch
          %278 = sbr.rel (%p276) target = $region16
        $region15: #{tpu_custom_call.1} parent=11 // pred_region
          %s280 = ssub.s32 512, 512
          %281 = vsyncadd [#allocation6], %s280
          %s282 = sshll.u32 [#allocation7], 4
          %s283 = int_to_ptr.vmem [resolvable:$true] %s282
          %288 = dma.hbm_to_vmem [thread:$0]  %s2, 512, %s283, [#allocation6], 128, 128, 8
        $region16: #{tpu_custom_call.1} parent=11 // pred_fallthru
          _
        // Predicated region
        $region17: #{tpu_custom_call.1} parent=11 // pred_check
          %p289 = pneg %p125
        $region18: #{tpu_custom_call.1} parent=11 // pred_check_branch
          %291 = sbr.rel (%p289) target = $region20
        $region19: #{tpu_custom_call.1} parent=11 // pred_region
          %s293 = ssub.s32 32, 32
          %294 = vsyncadd [#allocation9], %s293
          %s296 = sshll.u32 [#allocation8], 4
          %s297 = int_to_ptr.vmem [resolvable:$true] %s296
          %299 = dma.hbm_to_vmem [thread:$0]  %s3, 32, %s297, [#allocation9]
        $region20: #{tpu_custom_call.1} parent=11 // pred_fallthru
          _
        // Predicated region
        $region21: #{tpu_custom_call.1} parent=11 // pred_check
          %p300 = pneg %p146
        $region22: #{tpu_custom_call.1} parent=11 // pred_check_branch
          %302 = sbr.rel (%p300) target = $region24
        $region23: #{tpu_custom_call.1} parent=11 // pred_region
          %s304 = ssub.s32 1024, 1024
          %305 = vsyncadd [#allocation9], %s304
          %s306 = sshll.u32 [#allocation10], 4
          %s307 = int_to_ptr.vmem [resolvable:$true] %s306
          %312 = dma.hbm_to_vmem [thread:$0]  %s4, 1024, %s307, [#allocation9], 64, 64, 4
        $region24: #{tpu_custom_call.1} parent=11 // pred_fallthru
          _
        // Predicated region
        $region25: #{tpu_custom_call.1} parent=11 // pred_check
          %p313 = pneg %p167
        $region26: #{tpu_custom_call.1} parent=11 // pred_check_branch
          %315 = sbr.rel (%p313) target = $region28
        $region27: #{tpu_custom_call.1} parent=11 // pred_region
          %s317 = ssub.s32 16, 16
          %318 = vsyncadd [#allocation12], %s317
          %s320 = sshll.u32 [#allocation11], 4
          %s321 = int_to_ptr.vmem [resolvable:$true] %s320
          %323 = dma.hbm_to_vmem [thread:$0]  %s5, 16, %s321, [#allocation12]
        $region28: #{tpu_custom_call.1} parent=11 // pred_fallthru
          _
        // Predicated region
        $region29: #{tpu_custom_call.1} parent=11 // pred_check
          %p324 = pneg %p188
        $region30: #{tpu_custom_call.1} parent=11 // pred_check_branch
          %326 = sbr.rel (%p324) target = $region32
        $region31: #{tpu_custom_call.1} parent=11 // pred_region
          %s328 = ssub.s32 1024, 1024
          %329 = vsyncadd [#allocation12], %s328
          %s330 = sshll.u32 [#allocation13], 4
          %s331 = int_to_ptr.vmem [resolvable:$true] %s330
          %336 = dma.hbm_to_vmem [thread:$0]  %s6, 1024, %s331, [#allocation12], 64, 64, 4
        $region32: #{tpu_custom_call.1} parent=11 // pred_fallthru
          _
        // Predicated region
        $region33: #{tpu_custom_call.1} parent=11 // pred_check
          %p337 = pneg %p209
        $region34: #{tpu_custom_call.1} parent=11 // pred_check_branch
          %339 = sbr.rel (%p337) target = $region36
        $region35: #{tpu_custom_call.1} parent=11 // pred_region
          %s341 = ssub.s32 16, 16
          %342 = vsyncadd [#allocation15], %s341
          %s344 = sshll.u32 [#allocation14], 4
          %s345 = int_to_ptr.vmem [resolvable:$true] %s344
          %347 = dma.hbm_to_vmem [thread:$0]  %s7, 16, %s345, [#allocation15]
        $region36: #{tpu_custom_call.1} parent=11 // pred_fallthru
          _
      $region12: #{tpu_custom_call.1} parent=5 // pred_fallthru
        _
      %p348 = scmp.lt.s32.totalorder %s31, 2
      // Predicated region
      $region37: #{tpu_custom_call.1} parent=5 // pred_check
        %p349 = pneg %p348
      $region38: #{tpu_custom_call.1} parent=5 // pred_check_branch
        %351 = sbr.rel (%p349) target = $region40
      $region39: #{tpu_custom_call.1} parent=5 // pred_region
        // Predicated region
        $region41: #{tpu_custom_call.1} parent=39 // pred_check
          %p352 = pneg %p51
        $region42: #{tpu_custom_call.1} parent=39 // pred_check_branch
          %354 = sbr.rel (%p352) target = $region44
        $region43: #{tpu_custom_call.1} parent=39 // pred_region
          %s355 = sand.u32 %s41, 1
          %s356 = scalar_lea.sflag [#allocation3], %s355
          %s357 = sand.u32 %s41, 1
          %s358 = smul.addr %s357, 8
          %s359 = scalar_lea.vmem [#allocation2], %s358
          %s360 = smul.u32 2, %s31
          %s362 = ssub.s32 128, 128
          %363 = vsyncadd %s356, %s362
          %s364 = smul.addr %s360, 64
          %s365 = scalar_lea.hbm %s0, %s364
          %s366 = sshll.u32 %s359, 4
          %s367 = int_to_ptr.vmem [resolvable:$true] %s366
          %372 = dma.hbm_to_vmem [thread:$0]  %s365, 128, %s367, %s356, 64, 64, 4
        $region44: #{tpu_custom_call.1} parent=39 // pred_fallthru
          _
        // Predicated region
        $region45: #{tpu_custom_call.1} parent=39 // pred_check
          %p373 = pneg %p77
        $region46: #{tpu_custom_call.1} parent=39 // pred_check_branch
          %375 = sbr.rel (%p373) target = $region48
        $region47: #{tpu_custom_call.1} parent=39 // pred_region
          %s376 = sand.u32 %s31, 1
          %s377 = scalar_lea.sflag [#allocation6], %s376
          %s378 = sand.u32 %s67, 1
          %s379 = smul.addr %s378, 16
          %s380 = scalar_lea.vmem [#allocation5], %s379
          %s381 = smul.u32 2, %s31
          %s383 = ssub.s32 256, 256
          %384 = vsyncadd %s377, %s383
          %s385 = smul.addr %s381, 128
          %s386 = scalar_lea.hbm %s1, %s385
          %s387 = sshll.u32 %s380, 4
          %s388 = int_to_ptr.vmem [resolvable:$true] %s387
          %393 = dma.hbm_to_vmem [thread:$0]  %s386, 256, %s388, %s377, 128, 128, 8
        $region48: #{tpu_custom_call.1} parent=39 // pred_fallthru
          _
      $region40: #{tpu_custom_call.1} parent=5 // pred_fallthru
        _
      %p394 = scmp.le.s32.totalorder 1, %s31
      %p395 = scmp.lt.s32.totalorder %s31, 3
      %p396 = pnand %p394, %p395
      %p397 = pneg %p396
      // Predicated region
      $region49: #{tpu_custom_call.1} parent=5 // pred_check
        _
      $region50: #{tpu_custom_call.1} parent=5 // pred_check_branch
        %399 = sbr.rel (%p396) target = $region52
      $region51: #{tpu_custom_call.1} parent=5 // pred_region
        %s400 = ssub.s32 %s31, 1
        %s401 = sand.u32 %s44, 1
        %s402 = scalar_lea.sflag [#allocation3], %s401
        %s403 = sand.u32 %s44, 1
        %s404 = smul.addr %s403, 8
        %s405 = scalar_lea.vmem [#allocation2], %s404
        // Predicated region
        $region53: #{tpu_custom_call.1} parent=51 // pred_check
          %p406 = pneg %p57
        $region54: #{tpu_custom_call.1} parent=51 // pred_check_branch
          %408 = sbr.rel (%p406) target = $region56
        $region55: #{tpu_custom_call.1} parent=51 // pred_region
          %409 = dma.done %s402, 128
        $region56: #{tpu_custom_call.1} parent=51 // pred_fallthru
          _
        %s410 = sand.u32 %s36, 1
        %s411 = scalar_lea.sflag [#allocation6], %s410
        %s412 = sand.u32 %s70, 1
        %s413 = smul.addr %s412, 16
        %s414 = scalar_lea.vmem [#allocation5], %s413
        // Predicated region
        $region57: #{tpu_custom_call.1} parent=51 // pred_check
          %p415 = pneg %p83
        $region58: #{tpu_custom_call.1} parent=51 // pred_check_branch
          %417 = sbr.rel (%p415) target = $region60
        $region59: #{tpu_custom_call.1} parent=51 // pred_region
          %418 = dma.done %s411, 256
        $region60: #{tpu_custom_call.1} parent=51 // pred_fallthru
          _
        // Predicated region
        $region61: #{tpu_custom_call.1} parent=51 // pred_check
          %p419 = pneg %p104
        $region62: #{tpu_custom_call.1} parent=51 // pred_check_branch
          %421 = sbr.rel (%p419) target = $region64
        $region63: #{tpu_custom_call.1} parent=51 // pred_region
          %422 = dma.done [#allocation6], 512
        $region64: #{tpu_custom_call.1} parent=51 // pred_fallthru
          _
        // Predicated region
        $region65: #{tpu_custom_call.1} parent=51 // pred_check
          %p423 = pneg %p125
        $region66: #{tpu_custom_call.1} parent=51 // pred_check_branch
          %425 = sbr.rel (%p423) target = $region68
        $region67: #{tpu_custom_call.1} parent=51 // pred_region
          %426 = dma.done [#allocation9], 32
        $region68: #{tpu_custom_call.1} parent=51 // pred_fallthru
          _
        // Predicated region
        $region69: #{tpu_custom_call.1} parent=51 // pred_check
          %p427 = pneg %p146
        $region70: #{tpu_custom_call.1} parent=51 // pred_check_branch
          %429 = sbr.rel (%p427) target = $region72
        $region71: #{tpu_custom_call.1} parent=51 // pred_region
          %430 = dma.done [#allocation9], 1024
        $region72: #{tpu_custom_call.1} parent=51 // pred_fallthru
          _
        // Predicated region
        $region73: #{tpu_custom_call.1} parent=51 // pred_check
          %p431 = pneg %p167
        $region74: #{tpu_custom_call.1} parent=51 // pred_check_branch
          %433 = sbr.rel (%p431) target = $region76
        $region75: #{tpu_custom_call.1} parent=51 // pred_region
          %434 = dma.done [#allocation12], 16
        $region76: #{tpu_custom_call.1} parent=51 // pred_fallthru
          _
        // Predicated region
        $region77: #{tpu_custom_call.1} parent=51 // pred_check
          %p435 = pneg %p188
        $region78: #{tpu_custom_call.1} parent=51 // pred_check_branch
          %437 = sbr.rel (%p435) target = $region80
        $region79: #{tpu_custom_call.1} parent=51 // pred_region
          %438 = dma.done [#allocation12], 1024
        $region80: #{tpu_custom_call.1} parent=51 // pred_fallthru
          _
        // Predicated region
        $region81: #{tpu_custom_call.1} parent=51 // pred_check
          %p439 = pneg %p209
        $region82: #{tpu_custom_call.1} parent=51 // pred_check_branch
          %441 = sbr.rel (%p439) target = $region84
        $region83: #{tpu_custom_call.1} parent=51 // pred_region
          %442 = dma.done [#allocation15], 16
        $region84: #{tpu_custom_call.1} parent=51 // pred_fallthru
          _
        %s443 = sand.u32 %s44, 1
        %s444 = scalar_lea.sflag [#allocation3], %s443
        %s445 = sand.u32 %s44, 1
        %s446 = smul.addr %s445, 8
        %s447 = scalar_lea.vmem [#allocation2], %s446
        %p448 = pneg %p57
        %p449 = pneg %p54
        %s450 = sand.u32 %s36, 1
        %s451 = scalar_lea.sflag [#allocation6], %s450
        %s452 = sand.u32 %s70, 1
        %s453 = smul.addr %s452, 16
        %s454 = scalar_lea.vmem [#allocation5], %s453
        %p455 = pneg %p83
        %p456 = pneg %p80
        %p457 = pneg %p104
        %p458 = pneg %p101
        %p459 = pneg %p125
        %p460 = pneg %p122
        %p461 = pneg %p146
        %p462 = pneg %p143
        %p463 = pneg %p167
        %p464 = pneg %p164
        %p465 = pneg %p188
        %p466 = pneg %p185
        %p467 = pneg %p209
        %p468 = pneg %p206
        %p469 = pneg %p235
        %p470 = pneg %p232
        %s471 = sand.u32 %s222, 1
        %s472 = scalar_lea.sflag [#allocation4], %s471
        %s473 = sand.u32 %s222, 1
        %s474 = smul.addr %s473, 16
        %s475 = scalar_lea.vmem [#allocation16], %s474
        %p476 = pneg %p261
        %p477 = pneg %p258
        %s478 = sand.u32 %s248, 1
        %s479 = scalar_lea.sflag [#allocation18], %s478
        %s480 = sand.u32 %s248, 1
        %s481 = smul.addr %s480, 16
        %s482 = scalar_lea.vmem [#allocation17], %s481
        %s483 = smul.u32 2, %s36
        %s484 = smul.u32 2, %s36
        %s485 = smul.u32 2, %s36
        %s486 = smul.u32 2, %s36
        %v488 = vld [vmem:[%s405] sm:$0xf]
        %v489 = vld [vmem:[%s405 + $0x4] sm:$0xf]
        %v490 = vld [vmem:[#allocation7] sm:$0xff]
        %v491 = vld [vmem:[#allocation7 + $0x8] sm:$0xff]
        %v492 = vld [vmem:[#allocation7 + $0x10] sm:$0xff]
        %v493 = vld [vmem:[#allocation7 + $0x18] sm:$0xff]
        %v494 = vld [vmem:[#allocation8] sm:$0x3]
        %v496 = vlaneseq
        %v497 = vshrl.u32 %v496, 7
        %v498 = vsub.s32 0, %v497
        %v499 = vrot.slane %v494, %v498
        %v500 = vlaneseq
        %v501 = vshrl.u32 %v500, 7
        %v502 = vsub.s32 1, %v501
        %v503 = vrot.slane %v494, %v502
        %v508 = vunpack.c.l.b16 %v488
        %v509 = vunpack.c.l.b16 %v489
        %v510 = vpack.c.b16 %v509, %v508
        %v515 = vunpack.c.l.b16 %v490
        %v516 = vunpack.c.h.b16 %v490
        %v517 = vunpack.c.l.b16 %v491
        %v518 = vunpack.c.h.b16 %v491
        %v519 = vunpack.c.l.b16 %v492
        %v520 = vunpack.c.h.b16 %v492
        %v521 = vunpack.c.l.b16 %v493
        %v522 = vunpack.c.h.b16 %v493
        %v523 = vpack.c.b16 %v517, %v515
        %v524 = vpack.c.b16 %v518, %v516
        %v525 = vpack.c.b16 %v521, %v519
        %v526 = vpack.c.b16 %v522, %v520
        %vm531 = vcmask 261120
        %v533 = vsel %vm531, %v510, 0
        %535 = vmatprep.subr.bf16.mxu0 %v524
        %536 = vmatpush1.bf16.msra.mxu0 %v523
        %537 = vmatprep.subr.bf16.mxu0 %v526
        %538 = vmatpush1.bf16.msra.mxu0 %v525
        %539 = vmatprep.subr.bf16.mxu0 0
        %540 = vmatpush1.bf16.msra.mxu0 0
        %541 = vmatprep.subr.bf16.mxu0 0
        %542 = vmatpush1.bf16.msra.mxu0 0
        %543 = vmatprep.subr.bf16.mxu0 0
        %544 = vmatpush1.bf16.msra.mxu0 0
        %545 = vmatprep.subr.bf16.mxu0 0
        %546 = vmatpush1.bf16.msra.mxu0 0
        %547 = vmatprep.subr.bf16.mxu0 0
        %548 = vmatpush1.bf16.msra.mxu0 0
        %549 = vmatprep.subr.bf16.mxu0 0
        %550 = vmatpush1.bf16.msra.mxu0 0
        %551 = vmatprep.subr.bf16.mxu0 0
        %552 = vmatpush1.bf16.msra.mxu0 0
        %553 = vmatprep.subr.bf16.mxu0 0
        %554 = vmatpush1.bf16.msra.mxu0 0
        %555 = vmatprep.subr.bf16.mxu0 0
        %556 = vmatpush1.bf16.msra.mxu0 0
        %557 = vmatprep.subr.bf16.mxu0 0
        %558 = vmatpush1.bf16.msra.mxu0 0
        %559 = vmatprep.subr.bf16.mxu0 0
        %560 = vmatpush1.bf16.msra.mxu0 0
        %561 = vmatprep.subr.bf16.mxu0 0
        %562 = vmatpush1.bf16.msra.mxu0 0
        %563 = vmatprep.subr.bf16.mxu0 0
        %564 = vmatpush1.bf16.msra.mxu0 0
        %565 = vmatprep.subr.bf16.mxu0 0
        %566 = vmatpush1.bf16.msra.mxu0 0
        %567 = vmatprep.mubr.bf16.mxu0 0
        %568 = vmatmul.mubr.bf16.gmra.mrb[0].mxu0 %v533
        %v569 = vpop.f32.mrb[0].mxu0
        %v570 = vadd.f32 %v499, %v569
        %v571 = vpop.f32.mrb[0].mxu0
        %v572 = vadd.f32 %v503, %v571
        %v573 = vpop.f32.mrb[0].mxu0
        %v574 = vadd.f32 %v499, %v573
        %v575 = vpop.f32.mrb[0].mxu0
        %v576 = vadd.f32 %v503, %v575
        %577 = vdwg.mxu0
        %v578 = vmax.f32 %v570, 0.0
        %v579 = vmax.f32 %v574, 0.0
        %v580 = vpack.c.bf16 %v579, %v578
        %v581 = vld [vmem:[#allocation10] sm:$0xf]
        %v582 = vld [vmem:[#allocation10 + $0x4] sm:$0xf]
        %v583 = vld [vmem:[#allocation10 + $0x8] sm:$0xf]
        %v584 = vld [vmem:[#allocation10 + $0xc] sm:$0xf]
        %v585 = vld [vmem:[#allocation10 + $0x10] sm:$0xf]
        %v586 = vld [vmem:[#allocation10 + $0x14] sm:$0xf]
        %v587 = vld [vmem:[#allocation10 + $0x18] sm:$0xf]
        %v588 = vld [vmem:[#allocation10 + $0x1c] sm:$0xf]
        %v589 = vld [vmem:[#allocation10 + $0x20] sm:$0xf]
        %v590 = vld [vmem:[#allocation10 + $0x24] sm:$0xf]
        %v591 = vld [vmem:[#allocation10 + $0x28] sm:$0xf]
        %v592 = vld [vmem:[#allocation10 + $0x2c] sm:$0xf]
        %v593 = vld [vmem:[#allocation10 + $0x30] sm:$0xf]
        %v594 = vld [vmem:[#allocation10 + $0x34] sm:$0xf]
        %v595 = vld [vmem:[#allocation10 + $0x38] sm:$0xf]
        %v596 = vld [vmem:[#allocation10 + $0x3c] sm:$0xf]
        %v597 = vld [vmem:[#allocation11] sm:$0x1]
        %v599 = vlaneseq
        %v600 = vshrl.u32 %v599, 7
        %v601 = vsub.s32 0, %v600
        %v602 = vrot.slane %v597, %v601
        %v620 = vunpack.c.l.b16 %v581
        %v621 = vunpack.c.l.b16 %v582
        %v622 = vunpack.c.l.b16 %v583
        %v623 = vunpack.c.l.b16 %v584
        %v624 = vunpack.c.l.b16 %v585
        %v625 = vunpack.c.l.b16 %v586
        %v626 = vunpack.c.l.b16 %v587
        %v627 = vunpack.c.l.b16 %v588
        %v628 = vunpack.c.l.b16 %v589
        %v629 = vunpack.c.l.b16 %v590
        %v630 = vunpack.c.l.b16 %v591
        %v631 = vunpack.c.l.b16 %v592
        %v632 = vunpack.c.l.b16 %v593
        %v633 = vunpack.c.l.b16 %v594
        %v634 = vunpack.c.l.b16 %v595
        %v635 = vunpack.c.l.b16 %v596
        %v636 = vpack.c.b16 %v621, %v620
        %v637 = vpack.c.b16 %v623, %v622
        %v638 = vpack.c.b16 %v625, %v624
        %v639 = vpack.c.b16 %v627, %v626
        %v640 = vpack.c.b16 %v629, %v628
        %v641 = vpack.c.b16 %v631, %v630
        %v642 = vpack.c.b16 %v633, %v632
        %v643 = vpack.c.b16 %v635, %v634
        %652 = vmatprep.subr.bf16.mxu0 0
        %653 = vmatpush1.bf16.msra.mxu0 %v636
        %654 = vmatprep.subr.bf16.mxu0 0
        %655 = vmatpush1.bf16.msra.mxu0 %v637
        %656 = vmatprep.subr.bf16.mxu0 0
        %657 = vmatpush1.bf16.msra.mxu0 %v638
        %658 = vmatprep.subr.bf16.mxu0 0
        %659 = vmatpush1.bf16.msra.mxu0 %v639
        %660 = vmatprep.subr.bf16.mxu0 0
        %661 = vmatpush1.bf16.msra.mxu0 %v640
        %662 = vmatprep.subr.bf16.mxu0 0
        %663 = vmatpush1.bf16.msra.mxu0 %v641
        %664 = vmatprep.subr.bf16.mxu0 0
        %665 = vmatpush1.bf16.msra.mxu0 %v642
        %666 = vmatprep.subr.bf16.mxu0 0
        %667 = vmatpush1.bf16.msra.mxu0 %v643
        %668 = vmatprep.subr.bf16.mxu0 0
        %669 = vmatpush1.bf16.msra.mxu0 0
        %670 = vmatprep.subr.bf16.mxu0 0
        %671 = vmatpush1.bf16.msra.mxu0 0
        %672 = vmatprep.subr.bf16.mxu0 0
        %673 = vmatpush1.bf16.msra.mxu0 0
        %674 = vmatprep.subr.bf16.mxu0 0
        %675 = vmatpush1.bf16.msra.mxu0 0
        %676 = vmatprep.subr.bf16.mxu0 0
        %677 = vmatpush1.bf16.msra.mxu0 0
        %678 = vmatprep.subr.bf16.mxu0 0
        %679 = vmatpush1.bf16.msra.mxu0 0
        %680 = vmatprep.subr.bf16.mxu0 0
        %681 = vmatpush1.bf16.msra.mxu0 0
        %682 = vmatprep.subr.bf16.mxu0 0
        %683 = vmatpush1.bf16.msra.mxu0 0
        %684 = vmatprep.mubr.bf16.mxu0 0
        %685 = vmatmul.mubr.bf16.gmra.mrb[0].mxu0 %v580
        %v686 = vpop.f32.mrb[0].mxu0
        %v687 = vadd.f32 %v602, %v686
        %v688 = vpop.f32.mrb[0].mxu0
        %v689 = vpop.f32.mrb[0].mxu0
        %v690 = vadd.f32 %v602, %v689
        %v691 = vpop.f32.mrb[0].mxu0
        %692 = vdwg.mxu0
        %v693 = vmax.f32 %v687, 0.0
        %v694 = vmax.f32 %v690, 0.0
        %v695 = vpack.c.bf16 %v694, %v693
        %v696 = vld [vmem:[#allocation13] sm:$0xf]
        %v697 = vld [vmem:[#allocation13 + $0x4] sm:$0xf]
        %v698 = vld [vmem:[#allocation13 + $0x8] sm:$0xf]
        %v699 = vld [vmem:[#allocation13 + $0xc] sm:$0xf]
        %v700 = vld [vmem:[#allocation13 + $0x10] sm:$0xf]
        %v701 = vld [vmem:[#allocation13 + $0x14] sm:$0xf]
        %v702 = vld [vmem:[#allocation13 + $0x18] sm:$0xf]
        %v703 = vld [vmem:[#allocation13 + $0x1c] sm:$0xf]
        %v704 = vld [vmem:[#allocation13 + $0x20] sm:$0xf]
        %v705 = vld [vmem:[#allocation13 + $0x24] sm:$0xf]
        %v706 = vld [vmem:[#allocation13 + $0x28] sm:$0xf]
        %v707 = vld [vmem:[#allocation13 + $0x2c] sm:$0xf]
        %v708 = vld [vmem:[#allocation13 + $0x30] sm:$0xf]
        %v709 = vld [vmem:[#allocation13 + $0x34] sm:$0xf]
        %v710 = vld [vmem:[#allocation13 + $0x38] sm:$0xf]
        %v711 = vld [vmem:[#allocation13 + $0x3c] sm:$0xf]
        %v712 = vld [vmem:[#allocation14] sm:$0x1]
        %v714 = vlaneseq
        %v715 = vshrl.u32 %v714, 7
        %v716 = vsub.s32 0, %v715
        %v717 = vrot.slane %v712, %v716
        %v735 = vunpack.c.l.b16 %v696
        %v736 = vunpack.c.l.b16 %v697
        %v737 = vunpack.c.l.b16 %v698
        %v738 = vunpack.c.l.b16 %v699
        %v739 = vunpack.c.l.b16 %v700
        %v740 = vunpack.c.l.b16 %v701
        %v741 = vunpack.c.l.b16 %v702
        %v742 = vunpack.c.l.b16 %v703
        %v743 = vunpack.c.l.b16 %v704
        %v744 = vunpack.c.l.b16 %v705
        %v745 = vunpack.c.l.b16 %v706
        %v746 = vunpack.c.l.b16 %v707
        %v747 = vunpack.c.l.b16 %v708
        %v748 = vunpack.c.l.b16 %v709
        %v749 = vunpack.c.l.b16 %v710
        %v750 = vunpack.c.l.b16 %v711
        %v751 = vpack.c.b16 %v736, %v735
        %v752 = vpack.c.b16 %v738, %v737
        %v753 = vpack.c.b16 %v740, %v739
        %v754 = vpack.c.b16 %v742, %v741
        %v755 = vpack.c.b16 %v744, %v743
        %v756 = vpack.c.b16 %v746, %v745
        %v757 = vpack.c.b16 %v748, %v747
        %v758 = vpack.c.b16 %v750, %v749
        %767 = vmatprep.subr.bf16.mxu0 0
        %768 = vmatpush1.bf16.msra.mxu0 %v751
        %769 = vmatprep.subr.bf16.mxu0 0
        %770 = vmatpush1.bf16.msra.mxu0 %v752
        %771 = vmatprep.subr.bf16.mxu0 0
        %772 = vmatpush1.bf16.msra.mxu0 %v753
        %773 = vmatprep.subr.bf16.mxu0 0
        %774 = vmatpush1.bf16.msra.mxu0 %v754
        %775 = vmatprep.subr.bf16.mxu0 0
        %776 = vmatpush1.bf16.msra.mxu0 %v755
        %777 = vmatprep.subr.bf16.mxu0 0
        %778 = vmatpush1.bf16.msra.mxu0 %v756
        %779 = vmatprep.subr.bf16.mxu0 0
        %780 = vmatpush1.bf16.msra.mxu0 %v757
        %781 = vmatprep.subr.bf16.mxu0 0
        %782 = vmatpush1.bf16.msra.mxu0 %v758
        %783 = vmatprep.subr.bf16.mxu0 0
        %784 = vmatpush1.bf16.msra.mxu0 0
        %785 = vmatprep.subr.bf16.mxu0 0
        %786 = vmatpush1.bf16.msra.mxu0 0
        %787 = vmatprep.subr.bf16.mxu0 0
        %788 = vmatpush1.bf16.msra.mxu0 0
        %789 = vmatprep.subr.bf16.mxu0 0
        %790 = vmatpush1.bf16.msra.mxu0 0
        %791 = vmatprep.subr.bf16.mxu0 0
        %792 = vmatpush1.bf16.msra.mxu0 0
        %793 = vmatprep.subr.bf16.mxu0 0
        %794 = vmatpush1.bf16.msra.mxu0 0
        %795 = vmatprep.subr.bf16.mxu0 0
        %796 = vmatpush1.bf16.msra.mxu0 0
        %797 = vmatprep.subr.bf16.mxu0 0
        %798 = vmatpush1.bf16.msra.mxu0 0
        %799 = vmatprep.mubr.bf16.mxu0 0
        %800 = vmatmul.mubr.bf16.gmra.mrb[0].mxu0 %v695
        %v801 = vpop.f32.mrb[0].mxu0
        %v802 = vadd.f32 %v717, %v801
        %v803 = vpop.f32.mrb[0].mxu0
        %v804 = vpop.f32.mrb[0].mxu0
        %v805 = vadd.f32 %v717, %v804
        %v806 = vpop.f32.mrb[0].mxu0
        %807 = vdwg.mxu0
        %v808 = vld [vmem:[%s414] sm:$0xff]
        %v809 = vld [vmem:[%s414 + $0x8] sm:$0xff]
        %v810 = vadd.f32 %v802, %v808
        %v811 = vadd.f32 %v805, %v809
        %v812 = vxor.u32 %v810, 2147483648
        %v813 = vxor.u32 %v811, 2147483648
        %v814 = vmul.f32 %v812, 1.442695
        %v815 = vpow.pop %v814
        %v816 = vmul.f32 %v813, 1.442695
        %v817 = vpow.pop %v816
        %v818 = vadd.f32 %v815, 1.0
        %v819 = vadd.f32 %v817, 1.0
        %v820 = vrcp.pop %v818
        %v821 = vmul.f32 1.0, %v820
        %v822 = vrcp.pop %v819
        %v823 = vmul.f32 1.0, %v822
        %vm824 = vcmask 64512
        %825 = vst.msk [vmem:[%s475] sm:$0xff] %vm824, %v572
        %826 = vst.msk [vmem:[%s475 + $0x8] sm:$0xff] %vm824, %v576
        %vm827 = vcmask 31744
        %828 = vst.msk [vmem:[%s482] sm:$0xff] %vm827, %v821
        %829 = vst.msk [vmem:[%s482 + $0x8] sm:$0xff] %vm827, %v823
        %s830 = sand.u32 %s222, 1
        %s831 = scalar_lea.sflag [#allocation4], %s830
        %s832 = sand.u32 %s222, 1
        %s833 = smul.addr %s832, 16
        %s834 = scalar_lea.vmem [#allocation16], %s833
        %s835 = sand.u32 %s248, 1
        %s836 = scalar_lea.sflag [#allocation18], %s835
        %s837 = sand.u32 %s248, 1
        %s838 = smul.addr %s837, 16
        %s839 = scalar_lea.vmem [#allocation17], %s838
        // Predicated region
        $region85: #{tpu_custom_call.1} parent=51 // pred_check
          %p840 = pneg %p232
        $region86: #{tpu_custom_call.1} parent=51 // pred_check_branch
          %842 = sbr.rel (%p840) target = $region88
        $region87: #{tpu_custom_call.1} parent=51 // pred_region
          %s843 = smul.u32 2, %s36
          %s845 = ssub.s32 256, 256
          %846 = vsyncadd %s831, %s845
          %s847 = smul.addr %s843, 128
          %s848 = scalar_lea.hbm %s8, %s847
          %s849 = sshll.u32 %s834, 4
          %s850 = int_to_ptr.vmem [resolvable:$true] %s849
          %855 = dma.vmem_to_hbm [thread:$0]  %s850, 256, %s848, %s831, 128, 128, 8
        $region88: #{tpu_custom_call.1} parent=51 // pred_fallthru
          _
        // Predicated region
        $region89: #{tpu_custom_call.1} parent=51 // pred_check
          %p856 = pneg %p258
        $region90: #{tpu_custom_call.1} parent=51 // pred_check_branch
          %858 = sbr.rel (%p856) target = $region92
        $region91: #{tpu_custom_call.1} parent=51 // pred_region
          %s859 = smul.u32 2, %s36
          %s861 = ssub.s32 256, 256
          %862 = vsyncadd %s836, %s861
          %s863 = smul.addr %s859, 128
          %s864 = scalar_lea.hbm %s9, %s863
          %s865 = sshll.u32 %s839, 4
          %s866 = int_to_ptr.vmem [resolvable:$true] %s865
          %871 = dma.vmem_to_hbm [thread:$0]  %s866, 256, %s864, %s836, 128, 128, 8
        $region92: #{tpu_custom_call.1} parent=51 // pred_fallthru
          _
      $region52: #{tpu_custom_call.1} parent=5 // pred_fallthru
        _
      %p872 = scmp.le.s32.totalorder 2, %s31
      // Predicated region
      $region93: #{tpu_custom_call.1} parent=5 // pred_check
        %p873 = pneg %p872
      $region94: #{tpu_custom_call.1} parent=5 // pred_check_branch
        %875 = sbr.rel (%p873) target = $region96
      $region95: #{tpu_custom_call.1} parent=5 // pred_region
        %s876 = ssub.s32 %s31, 2
        // Predicated region
        $region97: #{tpu_custom_call.1} parent=95 // pred_check
          %p877 = pneg %p238
        $region98: #{tpu_custom_call.1} parent=95 // pred_check_branch
          %879 = sbr.rel (%p877) target = $region100
        $region99: #{tpu_custom_call.1} parent=95 // pred_region
          %s880 = sand.u32 %s223, 1
          %s881 = scalar_lea.sflag [#allocation4], %s880
          %s882 = sand.u32 %s223, 1
          %s883 = smul.addr %s882, 16
          %s884 = scalar_lea.vmem [#allocation16], %s883
          %885 = dma.done %s881, 256
        $region100: #{tpu_custom_call.1} parent=95 // pred_fallthru
          _
        // Predicated region
        $region101: #{tpu_custom_call.1} parent=95 // pred_check
          %p886 = pneg %p264
        $region102: #{tpu_custom_call.1} parent=95 // pred_check_branch
          %888 = sbr.rel (%p886) target = $region104
        $region103: #{tpu_custom_call.1} parent=95 // pred_region
          %s889 = sand.u32 %s249, 1
          %s890 = scalar_lea.sflag [#allocation18], %s889
          %s891 = sand.u32 %s249, 1
          %s892 = smul.addr %s891, 16
          %s893 = scalar_lea.vmem [#allocation17], %s892
          %894 = dma.done %s890, 256
        $region104: #{tpu_custom_call.1} parent=95 // pred_fallthru
          _
      $region96: #{tpu_custom_call.1} parent=5 // pred_fallthru
        _
    $region6: #{tpu_custom_call.1} parent=1 // loop_footer
      %s35 = sadd.s32 1, %s31
    $region7: #{tpu_custom_call.1} parent=1 // loop_footer_branch
      %30 = sbr.rel target = $region3
    $region8: #{tpu_custom_call.1} parent=1 // loop_exit
      _
    %895 = vsyncpa [#allocation3], 1
    %s896 = scalar_lea.sflag [#allocation3], 1
    %897 = vsyncpa %s896, 1
    %898 = vsyncpa [#allocation6], 1
    %s899 = scalar_lea.sflag [#allocation6], 1
    %900 = vsyncpa %s899, 1
    %901 = vsyncpa [#allocation9], 1
    %902 = vsyncpa [#allocation12], 1
    %903 = vsyncpa [#allocation15], 1
    %904 = vsyncpa [#allocation4], 1
    %s905 = scalar_lea.sflag [#allocation4], 1
    %906 = vsyncpa %s905, 1
    %907 = vsyncpa [#allocation18], 1
    %s908 = scalar_lea.sflag [#allocation18], 1
    %909 = vsyncpa %s908, 1

// kernel: tpu_custom_call.1
$region0: #{tpu_custom_call.1}
  #allocation0 [shape = 'u32[]', space=smem, size = 0x4, offset = 0x4, fixed_abs, tag = 'smem constant byte address 0x4 - core index']
  #allocation1 [shape = 'u32[144,128]{1,0:T(1,128)}', space=vmem, size = 0x12000, scoped, tag = 'internal scratch']
  %s0 = inlined_call_operand.hbm [shape: bf16[32,32], index: 0, kind: input, shape index: {}]
  %s1 = inlined_call_operand.hbm [shape: f32[32,4], index: 1, kind: input, shape index: {}]
  %s2 = inlined_call_operand.hbm [shape: bf16[32,256], index: 2, kind: input, shape index: {}]
  %s3 = inlined_call_operand.hbm [shape: f32[1,256], index: 3, kind: input, shape index: {}]
  %s4 = inlined_call_operand.hbm [shape: bf16[128,128], index: 4, kind: input, shape index: {}]
  %s5 = inlined_call_operand.hbm [shape: f32[1,128], index: 5, kind: input, shape index: {}]
  %s6 = inlined_call_operand.hbm [shape: bf16[128,128], index: 6, kind: input, shape index: {}]
  %s7 = inlined_call_operand.hbm [shape: f32[1,128], index: 7, kind: input, shape index: {}]
  %s8 = inlined_call_operand.hbm [shape: f32[32,8], index: 8, kind: output, shape index: {0}]
  %s9 = inlined_call_operand.hbm [shape: f32[32,4], index: 9, kind: output, shape index: {1}]
  %10 = xla_tuple %s8, %s9
  %s11 = sld [smem:[#allocation0]]
  $region105: #{tpu_custom_call.1} parent=0
    _
  %s13 = ssub.s32 1, %s11
  %s14 = scalar_select 0, %s13, %s11
  $region1: #{tpu_custom_call.1} parent=0
    #allocation2 [shape = 'u8[8192]{0}', space=vmem, size = 0x2000, scoped, tag = 'input window, operand 0']
    #allocation3 [shape = 's32[2]{0}', space=sflag, size = 0x8, scoped, tag = 'scoped memory for tpu_custom_call.1']
    #allocation4 [shape = 's32[2]{0}', space=sflag, size = 0x8, scoped, tag = 'scoped memory for tpu_custom_call.1']
    #allocation5 [shape = 'u8[16384]{0}', space=vmem, size = 0x4000, scoped, tag = 'input window, operand 1']
    #allocation6 [shape = 's32[2]{0}', space=sflag, size = 0x8, scoped, tag = 'scoped memory for tpu_custom_call.1']
    #allocation7 [shape = 'u8[16384]{0}', space=vmem, size = 0x4000, scoped, tag = 'input window, operand 2, single buffered']
    #allocation8 [shape = 'u8[1024]{0}', space=vmem, size = 0x400, scoped, tag = 'input window, operand 3, single buffered']
    #allocation9 [shape = 's32[1]{0}', space=sflag, size = 0x4, scoped, tag = 'scoped memory for tpu_custom_call.1']
    #allocation10 [shape = 'u8[32768]{0}', space=vmem, size = 0x8000, scoped, tag = 'input window, operand 4, single buffered']
    #allocation11 [shape = 'u8[512]{0}', space=vmem, size = 0x400, scoped, tag = 'input window, operand 5, single buffered']
    #allocation12 [shape = 's32[1]{0}', space=sflag, size = 0x4, scoped, tag = 'scoped memory for tpu_custom_call.1']
    #allocation13 [shape = 'u8[32768]{0}', space=vmem, size = 0x8000, scoped, tag = 'input window, operand 6, single buffered']
    #allocation14 [shape = 'u8[512]{0}', space=vmem, size = 0x400, scoped, tag = 'input window, operand 7, single buffered']
    #allocation15 [shape = 's32[1]{0}', space=sflag, size = 0x4, scoped, tag = 'scoped memory for tpu_custom_call.1']
    #allocation16 [shape = 'u8[16384]{0}', space=vmem, size = 0x4000, scoped, tag = 'output window, operand 0']
    #allocation17 [shape = 'u8[16384]{0}', space=vmem, size = 0x4000, scoped, tag = 'output window, operand 1']
    #allocation18 [shape = 's32[2]{0}', space=sflag, size = 0x8, scoped, tag = 'scoped memory for tpu_custom_call.1']
    %15 = vsyncpa [#allocation3], 0
    %s16 = scalar_lea.sflag [#allocation3], 1
    %17 = vsyncpa %s16, 0
    %18 = vsyncpa [#allocation6], 0
    %s19 = scalar_lea.sflag [#allocation6], 1
    %20 = vsyncpa %s19, 0
    %21 = vsyncpa [#allocation9], 0
    %22 = vsyncpa [#allocation12], 0
    %23 = vsyncpa [#allocation15], 0
    %24 = vsyncpa [#allocation4], 0
    %s25 = scalar_lea.sflag [#allocation4], 1
    %26 = vsyncpa %s25, 0
    %27 = vsyncpa [#allocation18], 0
    %s28 = scalar_lea.sflag [#allocation18], 1
    %29 = vsyncpa %s28, 0
    loop: start=0, step=1, limit=4
    $region2: #{tpu_custom_call.1} parent=1 // loop_pre_header
      _
    $region3: #{tpu_custom_call.1} parent=1 // loop_header
      %s31 = sphi 0, %s35
      %p32 = scmp.ge.s32.totalorder %s31, 4
      %s41 = sphi 0, %s43
      %s44 = sphi 0, %s41
      %s45 = sphi 0, %s44
      %s61 = sphi 0, %s45
      %s67 = sphi 0, %s69
      %s70 = sphi 0, %s67
      %s71 = sphi 0, %s70
      %s87 = sphi 0, %s71
      %s91 = sphi 0, %s91
      %s93 = sphi 0, %s91
      %s94 = sphi 0, %s93
      %s108 = sphi 0, %s94
      %s112 = sphi 0, %s112
      %s114 = sphi 0, %s112
      %s115 = sphi 0, %s114
      %s129 = sphi 0, %s115
      %s133 = sphi 0, %s133
      %s135 = sphi 0, %s133
      %s136 = sphi 0, %s135
      %s150 = sphi 0, %s136
      %s154 = sphi 0, %s154
      %s156 = sphi 0, %s154
      %s157 = sphi 0, %s156
      %s171 = sphi 0, %s157
      %s175 = sphi 0, %s175
      %s177 = sphi 0, %s175
      %s178 = sphi 0, %s177
      %s192 = sphi 0, %s178
      %s196 = sphi 0, %s196
      %s198 = sphi 0, %s196
      %s199 = sphi 0, %s198
      %s213 = sphi 0, %s199
      %s219 = sphi 0, %s221
      %s222 = sphi 0, %s219
      %s223 = sphi 0, %s222
      %s239 = sphi 0, %s223
      %s245 = sphi 0, %s247
      %s248 = sphi 0, %s245
      %s249 = sphi 0, %s248
      %s265 = sphi 0, %s249
    $region4: #{tpu_custom_call.1} parent=1 // loop_header_branch
      %34 = sbr.rel (%p32) target = $region8
    $region5: #{tpu_custom_call.1} parent=1 // loop_body
      %s36 = ssub.s32 %s31, 1
      %s37 = ssub.s32 %s31, 2
      %s38 = sadd.s32 %s31, 1
      %s39 = ssub.s32 %s31, %s38
      %p40 = scmp.eq.s32.totalorder %s39, 0
      %s42 = sadd.s32 %s41, 1
      %s43 = scalar_select %p40, %s41, %s42
      %p46 = pneg %p40
      %p47 = scmp.eq.s32.totalorder %s31, 1
      %p48 = por %p46, %p47
      %p49 = scmp.ne.s32.totalorder %s41, %s44
      %p50 = scmp.eq.s32.totalorder %s31, 0
      %p51 = por %p49, %p50
      %p52 = scmp.ne.s32.totalorder %s41, %s44
      %p53 = scmp.eq.s32.totalorder %s36, 1
      %p54 = por %p52, %p53
      %p55 = scmp.ne.s32.totalorder %s44, %s45
      %p56 = scmp.eq.s32.totalorder %s36, 0
      %p57 = por %p55, %p56
      %p58 = scmp.ne.s32.totalorder %s44, %s45
      %p59 = scmp.eq.s32.totalorder %s37, 1
      %p60 = por %p58, %p59
      %p62 = scmp.ne.s32.totalorder %s45, %s61
      %p63 = scmp.eq.s32.totalorder %s37, 0
      %p64 = por %p62, %p63
      %s65 = ssub.s32 %s31, %s38
      %p66 = scmp.eq.s32.totalorder %s65, 0
      %s68 = sadd.s32 %s67, 1
      %s69 = scalar_select %p66, %s67, %s68
      %p72 = pneg %p66
      %p73 = scmp.eq.s32.totalorder %s31, 1
      %p74 = por %p72, %p73
      %p75 = scmp.ne.s32.totalorder %s67, %s70
      %p76 = scmp.eq.s32.totalorder %s31, 0
      %p77 = por %p75, %p76
      %p78 = scmp.ne.s32.totalorder %s67, %s70
      %p79 = scmp.eq.s32.totalorder %s36, 1
      %p80 = por %p78, %p79
      %p81 = scmp.ne.s32.totalorder %s70, %s71
      %p82 = scmp.eq.s32.totalorder %s36, 0
      %p83 = por %p81, %p82
      %p84 = scmp.ne.s32.totalorder %s70, %s71
      %p85 = scmp.eq.s32.totalorder %s37, 1
      %p86 = por %p84, %p85
      %p88 = scmp.ne.s32.totalorder %s71, %s87
      %p89 = scmp.eq.s32.totalorder %s37, 0
      %p90 = por %p88, %p89
      %s92 = sadd.s32 %s91, 1
      %p95 = scmp.eq.s32.totalorder %s31, 1
      %p96 = scmp.ne.s32.totalorder %s91, %s93
      %p97 = scmp.eq.s32.totalorder %s31, 0
      %p98 = por %p96, %p97
      %p99 = scmp.ne.s32.totalorder %s91, %s93
      %p100 = scmp.eq.s32.totalorder %s36, 1
      %p101 = por %p99, %p100
      %p102 = scmp.ne.s32.totalorder %s93, %s94
      %p103 = scmp.eq.s32.totalorder %s36, 0
      %p104 = por %p102, %p103
      %p105 = scmp.ne.s32.totalorder %s93, %s94
      %p106 = scmp.eq.s32.totalorder %s37, 1
      %p107 = por %p105, %p106
      %p109 = scmp.ne.s32.totalorder %s94, %s108
      %p110 = scmp.eq.s32.totalorder %s37, 0
      %p111 = por %p109, %p110
      %s113 = sadd.s32 %s112, 1
      %p116 = scmp.eq.s32.totalorder %s31, 1
      %p117 = scmp.ne.s32.totalorder %s112, %s114
      %p118 = scmp.eq.s32.totalorder %s31, 0
      %p119 = por %p117, %p118
      %p120 = scmp.ne.s32.totalorder %s112, %s114
      %p121 = scmp.eq.s32.totalorder %s36, 1
      %p122 = por %p120, %p121
      %p123 = scmp.ne.s32.totalorder %s114, %s115
      %p124 = scmp.eq.s32.totalorder %s36, 0
      %p125 = por %p123, %p124
      %p126 = scmp.ne.s32.totalorder %s114, %s115
      %p127 = scmp.eq.s32.totalorder %s37, 1
      %p128 = por %p126, %p127
      %p130 = scmp.ne.s32.totalorder %s115, %s129
      %p131 = scmp.eq.s32.totalorder %s37, 0
      %p132 = por %p130, %p131
      %s134 = sadd.s32 %s133, 1
      %p137 = scmp.eq.s32.totalorder %s31, 1
      %p138 = scmp.ne.s32.totalorder %s133, %s135
      %p139 = scmp.eq.s32.totalorder %s31, 0
      %p140 = por %p138, %p139
      %p141 = scmp.ne.s32.totalorder %s133, %s135
      %p142 = scmp.eq.s32.totalorder %s36, 1
      %p143 = por %p141, %p142
      %p144 = scmp.ne.s32.totalorder %s135, %s136
      %p145 = scmp.eq.s32.totalorder %s36, 0
      %p146 = por %p144, %p145
      %p147 = scmp.ne.s32.totalorder %s135, %s136
      %p148 = scmp.eq.s32.totalorder %s37, 1
      %p149 = por %p147, %p148
      %p151 = scmp.ne.s32.totalorder %s136, %s150
      %p152 = scmp.eq.s32.totalorder %s37, 0
      %p153 = por %p151, %p152
      %s155 = sadd.s32 %s154, 1
      %p158 = scmp.eq.s32.totalorder %s31, 1
      %p159 = scmp.ne.s32.totalorder %s154, %s156
      %p160 = scmp.eq.s32.totalorder %s31, 0
      %p161 = por %p159, %p160
      %p162 = scmp.ne.s32.totalorder %s154, %s156
      %p163 = scmp.eq.s32.totalorder %s36, 1
      %p164 = por %p162, %p163
      %p165 = scmp.ne.s32.totalorder %s156, %s157
      %p166 = scmp.eq.s32.totalorder %s36, 0
      %p167 = por %p165, %p166
      %p168 = scmp.ne.s32.totalorder %s156, %s157
      %p169 = scmp.eq.s32.totalorder %s37, 1
      %p170 = por %p168, %p169
      %p172 = scmp.ne.s32.totalorder %s157, %s171
      %p173 = scmp.eq.s32.totalorder %s37, 0
      %p174 = por %p172, %p173
      %s176 = sadd.s32 %s175, 1
      %p179 = scmp.eq.s32.totalorder %s31, 1
      %p180 = scmp.ne.s32.totalorder %s175, %s177
      %p181 = scmp.eq.s32.totalorder %s31, 0
      %p182 = por %p180, %p181
      %p183 = scmp.ne.s32.totalorder %s175, %s177
      %p184 = scmp.eq.s32.totalorder %s36, 1
      %p185 = por %p183, %p184
      %p186 = scmp.ne.s32.totalorder %s177, %s178
      %p187 = scmp.eq.s32.totalorder %s36, 0
      %p188 = por %p186, %p187
      %p189 = scmp.ne.s32.totalorder %s177, %s178
      %p190 = scmp.eq.s32.totalorder %s37, 1
      %p191 = por %p189, %p190
      %p193 = scmp.ne.s32.totalorder %s178, %s192
      %p194 = scmp.eq.s32.totalorder %s37, 0
      %p195 = por %p193, %p194
      %s197 = sadd.s32 %s196, 1
      %p200 = scmp.eq.s32.totalorder %s31, 1
      %p201 = scmp.ne.s32.totalorder %s196, %s198
      %p202 = scmp.eq.s32.totalorder %s31, 0
      %p203 = por %p201, %p202
      %p204 = scmp.ne.s32.totalorder %s196, %s198
      %p205 = scmp.eq.s32.totalorder %s36, 1
      %p206 = por %p204, %p205
      %p207 = scmp.ne.s32.totalorder %s198, %s199
      %p208 = scmp.eq.s32.totalorder %s36, 0
      %p209 = por %p207, %p208
      %p210 = scmp.ne.s32.totalorder %s198, %s199
      %p211 = scmp.eq.s32.totalorder %s37, 1
      %p212 = por %p210, %p211
      %p214 = scmp.ne.s32.totalorder %s199, %s213
      %p215 = scmp.eq.s32.totalorder %s37, 0
      %p216 = por %p214, %p215
      %s217 = ssub.s32 %s31, %s38
      %p218 = scmp.eq.s32.totalorder %s217, 0
      %s220 = sadd.s32 %s219, 1
      %s221 = scalar_select %p218, %s219, %s220
      %p224 = pneg %p218
      %p225 = scmp.eq.s32.totalorder %s31, 1
      %p226 = por %p224, %p225
      %p227 = scmp.ne.s32.totalorder %s219, %s222
      %p228 = scmp.eq.s32.totalorder %s31, 0
      %p229 = por %p227, %p228
      %p230 = scmp.ne.s32.totalorder %s219, %s222
      %p231 = scmp.eq.s32.totalorder %s36, 1
      %p232 = por %p230, %p231
      %p233 = scmp.ne.s32.totalorder %s222, %s223
      %p234 = scmp.eq.s32.totalorder %s36, 0
      %p235 = por %p233, %p234
      %p236 = scmp.ne.s32.totalorder %s222, %s223
      %p237 = scmp.eq.s32.totalorder %s37, 1
      %p238 = por %p236, %p237
      %p240 = scmp.ne.s32.totalorder %s223, %s239
      %p241 = scmp.eq.s32.totalorder %s37, 0
      %p242 = por %p240, %p241
      %s243 = ssub.s32 %s31, %s38
      %p244 = scmp.eq.s32.totalorder %s243, 0
      %s246 = sadd.s32 %s245, 1
      %s247 = scalar_select %p244, %s245, %s246
      %p250 = pneg %p244
      %p251 = scmp.eq.s32.totalorder %s31, 1
      %p252 = por %p250, %p251
      %p253 = scmp.ne.s32.totalorder %s245, %s248
      %p254 = scmp.eq.s32.totalorder %s31, 0
      %p255 = por %p253, %p254
      %p256 = scmp.ne.s32.totalorder %s245, %s248
      %p257 = scmp.eq.s32.totalorder %s36, 1
      %p258 = por %p256, %p257
      %p259 = scmp.ne.s32.totalorder %s248, %s249
      %p260 = scmp.eq.s32.totalorder %s36, 0
      %p261 = por %p259, %p260
      %p262 = scmp.ne.s32.totalorder %s248, %s249
      %p263 = scmp.eq.s32.totalorder %s37, 1
      %p264 = por %p262, %p263
      %p266 = scmp.ne.s32.totalorder %s249, %s265
      %p267 = scmp.eq.s32.totalorder %s37, 0
      %p268 = por %p266, %p267
      %p269 = scmp.le.s32.totalorder 1, %s31
      %p270 = scmp.lt.s32.totalorder %s31, 3
      %p271 = pnand %p269, %p270
      %p272 = pneg %p271
      // Predicated region
      $region9: #{tpu_custom_call.1} parent=5 // pred_check
        _
      $region10: #{tpu_custom_call.1} parent=5 // pred_check_branch
        %274 = sbr.rel (%p271) target = $region12
      $region11: #{tpu_custom_call.1} parent=5 // pred_region
        %s275 = ssub.s32 %s31, 1
        // Predicated region
        $region13: #{tpu_custom_call.1} parent=11 // pred_check
          %p276 = pneg %p104
        $region14: #{tpu_custom_call.1} parent=11 // pred_check_branch
          %278 = sbr.rel (%p276) target = $region16
        $region15: #{tpu_custom_call.1} parent=11 // pred_region
          %s280 = ssub.s32 512, 512
          %281 = vsyncadd [#allocation6], %s280
          %s282 = sshll.u32 [#allocation7], 4
          %s283 = int_to_ptr.vmem [resolvable:$true] %s282
          %288 = dma.hbm_to_vmem [thread:$0]  %s2, 512, %s283, [#allocation6], 128, 128, 8
        $region16: #{tpu_custom_call.1} parent=11 // pred_fallthru
          _
        // Predicated region
        $region17: #{tpu_custom_call.1} parent=11 // pred_check
          %p289 = pneg %p125
        $region18: #{tpu_custom_call.1} parent=11 // pred_check_branch
          %291 = sbr.rel (%p289) target = $region20
        $region19: #{tpu_custom_call.1} parent=11 // pred_region
          %s293 = ssub.s32 32, 32
          %294 = vsyncadd [#allocation9], %s293
          %s296 = sshll.u32 [#allocation8], 4
          %s297 = int_to_ptr.vmem [resolvable:$true] %s296
          %299 = dma.hbm_to_vmem [thread:$0]  %s3, 32, %s297, [#allocation9]
        $region20: #{tpu_custom_call.1} parent=11 // pred_fallthru
          _
        // Predicated region
        $region21: #{tpu_custom_call.1} parent=11 // pred_check
          %p300 = pneg %p146
        $region22: #{tpu_custom_call.1} parent=11 // pred_check_branch
          %302 = sbr.rel (%p300) target = $region24
        $region23: #{tpu_custom_call.1} parent=11 // pred_region
          %s304 = ssub.s32 1024, 1024
          %305 = vsyncadd [#allocation9], %s304
          %s306 = sshll.u32 [#allocation10], 4
          %s307 = int_to_ptr.vmem [resolvable:$true] %s306
          %312 = dma.hbm_to_vmem [thread:$0]  %s4, 1024, %s307, [#allocation9], 64, 64, 4
        $region24: #{tpu_custom_call.1} parent=11 // pred_fallthru
          _
        // Predicated region
        $region25: #{tpu_custom_call.1} parent=11 // pred_check
          %p313 = pneg %p167
        $region26: #{tpu_custom_call.1} parent=11 // pred_check_branch
          %315 = sbr.rel (%p313) target = $region28
        $region27: #{tpu_custom_call.1} parent=11 // pred_region
          %s317 = ssub.s32 16, 16
          %318 = vsyncadd [#allocation12], %s317
          %s320 = sshll.u32 [#allocation11], 4
          %s321 = int_to_ptr.vmem [resolvable:$true] %s320
          %323 = dma.hbm_to_vmem [thread:$0]  %s5, 16, %s321, [#allocation12]
        $region28: #{tpu_custom_call.1} parent=11 // pred_fallthru
          _
        // Predicated region
        $region29: #{tpu_custom_call.1} parent=11 // pred_check
          %p324 = pneg %p188
        $region30: #{tpu_custom_call.1} parent=11 // pred_check_branch
          %326 = sbr.rel (%p324) target = $region32
        $region31: #{tpu_custom_call.1} parent=11 // pred_region
          %s328 = ssub.s32 1024, 1024
          %329 = vsyncadd [#allocation12], %s328
          %s330 = sshll.u32 [#allocation13], 4
          %s331 = int_to_ptr.vmem [resolvable:$true] %s330
          %336 = dma.hbm_to_vmem [thread:$0]  %s6, 1024, %s331, [#allocation12], 64, 64, 4
        $region32: #{tpu_custom_call.1} parent=11 // pred_fallthru
          _
        // Predicated region
        $region33: #{tpu_custom_call.1} parent=11 // pred_check
          %p337 = pneg %p209
        $region34: #{tpu_custom_call.1} parent=11 // pred_check_branch
          %339 = sbr.rel (%p337) target = $region36
        $region35: #{tpu_custom_call.1} parent=11 // pred_region
          %s341 = ssub.s32 16, 16
          %342 = vsyncadd [#allocation15], %s341
          %s344 = sshll.u32 [#allocation14], 4
          %s345 = int_to_ptr.vmem [resolvable:$true] %s344
          %347 = dma.hbm_to_vmem [thread:$0]  %s7, 16, %s345, [#allocation15]
        $region36: #{tpu_custom_call.1} parent=11 // pred_fallthru
          _
      $region12: #{tpu_custom_call.1} parent=5 // pred_fallthru
        _
      %p348 = scmp.lt.s32.totalorder %s31, 2
      // Predicated region
      $region37: #{tpu_custom_call.1} parent=5 // pred_check
        %p349 = pneg %p348
      $region38: #{tpu_custom_call.1} parent=5 // pred_check_branch
        %351 = sbr.rel (%p349) target = $region40
      $region39: #{tpu_custom_call.1} parent=5 // pred_region
        // Predicated region
        $region41: #{tpu_custom_call.1} parent=39 // pred_check
          %p352 = pneg %p51
        $region42: #{tpu_custom_call.1} parent=39 // pred_check_branch
          %354 = sbr.rel (%p352) target = $region44
        $region43: #{tpu_custom_call.1} parent=39 // pred_region
          %s355 = sand.u32 %s41, 1
          %s356 = scalar_lea.sflag [#allocation3], %s355
          %s357 = sand.u32 %s41, 1
          %s358 = smul.addr %s357, 8
          %s359 = scalar_lea.vmem [#allocation2], %s358
          %s360 = smul.u32 2, %s31
          %s362 = ssub.s32 128, 128
          %363 = vsyncadd %s356, %s362
          %s364 = smul.addr %s360, 64
          %s365 = scalar_lea.hbm %s0, %s364
          %s366 = sshll.u32 %s359, 4
          %s367 = int_to_ptr.vmem [resolvable:$true] %s366
          %372 = dma.hbm_to_vmem [thread:$0]  %s365, 128, %s367, %s356, 64, 64, 4
        $region44: #{tpu_custom_call.1} parent=39 // pred_fallthru
          _
        // Predicated region
        $region45: #{tpu_custom_call.1} parent=39 // pred_check
          %p373 = pneg %p77
        $region46: #{tpu_custom_call.1} parent=39 // pred_check_branch
          %375 = sbr.rel (%p373) target = $region48
        $region47: #{tpu_custom_call.1} parent=39 // pred_region
          %s376 = sand.u32 %s31, 1
          %s377 = scalar_lea.sflag [#allocation6], %s376
          %s378 = sand.u32 %s67, 1
          %s379 = smul.addr %s378, 16
          %s380 = scalar_lea.vmem [#allocation5], %s379
          %s381 = smul.u32 2, %s31
          %s383 = ssub.s32 256, 256
          %384 = vsyncadd %s377, %s383
          %s385 = smul.addr %s381, 128
          %s386 = scalar_lea.hbm %s1, %s385
          %s387 = sshll.u32 %s380, 4
          %s388 = int_to_ptr.vmem [resolvable:$true] %s387
          %393 = dma.hbm_to_vmem [thread:$0]  %s386, 256, %s388, %s377, 128, 128, 8
        $region48: #{tpu_custom_call.1} parent=39 // pred_fallthru
          _
      $region40: #{tpu_custom_call.1} parent=5 // pred_fallthru
        _
      %p394 = scmp.le.s32.totalorder 1, %s31
      %p395 = scmp.lt.s32.totalorder %s31, 3
      %p396 = pnand %p394, %p395
      %p397 = pneg %p396
      // Predicated region
      $region49: #{tpu_custom_call.1} parent=5 // pred_check
        _
      $region50: #{tpu_custom_call.1} parent=5 // pred_check_branch
        %399 = sbr.rel (%p396) target = $region52
      $region51: #{tpu_custom_call.1} parent=5 // pred_region
        %s400 = ssub.s32 %s31, 1
        %s401 = sand.u32 %s44, 1
        %s402 = scalar_lea.sflag [#allocation3], %s401
        %s403 = sand.u32 %s44, 1
        %s404 = smul.addr %s403, 8
        %s405 = scalar_lea.vmem [#allocation2], %s404
        // Predicated region
        $region53: #{tpu_custom_call.1} parent=51 // pred_check
          %p406 = pneg %p57
        $region54: #{tpu_custom_call.1} parent=51 // pred_check_branch
          %408 = sbr.rel (%p406) target = $region56
        $region55: #{tpu_custom_call.1} parent=51 // pred_region
          %409 = dma.done %s402, 128
        $region56: #{tpu_custom_call.1} parent=51 // pred_fallthru
          _
        %s410 = sand.u32 %s36, 1
        %s411 = scalar_lea.sflag [#allocation6], %s410
        %s412 = sand.u32 %s70, 1
        %s413 = smul.addr %s412, 16
        %s414 = scalar_lea.vmem [#allocation5], %s413
        // Predicated region
        $region57: #{tpu_custom_call.1} parent=51 // pred_check
          %p415 = pneg %p83
        $region58: #{tpu_custom_call.1} parent=51 // pred_check_branch
          %417 = sbr.rel (%p415) target = $region60
        $region59: #{tpu_custom_call.1} parent=51 // pred_region
          %418 = dma.done %s411, 256
        $region60: #{tpu_custom_call.1} parent=51 // pred_fallthru
          _
        // Predicated region
        $region61: #{tpu_custom_call.1} parent=51 // pred_check
          %p419 = pneg %p104
        $region62: #{tpu_custom_call.1} parent=51 // pred_check_branch
          %421 = sbr.rel (%p419) target = $region64
        $region63: #{tpu_custom_call.1} parent=51 // pred_region
          %422 = dma.done [#allocation6], 512
        $region64: #{tpu_custom_call.1} parent=51 // pred_fallthru
          _
        // Predicated region
        $region65: #{tpu_custom_call.1} parent=51 // pred_check
          %p423 = pneg %p125
        $region66: #{tpu_custom_call.1} parent=51 // pred_check_branch
          %425 = sbr.rel (%p423) target = $region68
        $region67: #{tpu_custom_call.1} parent=51 // pred_region
          %426 = dma.done [#allocation9], 32
        $region68: #{tpu_custom_call.1} parent=51 // pred_fallthru
          _
        // Predicated region
        $region69: #{tpu_custom_call.1} parent=51 // pred_check
          %p427 = pneg %p146
        $region70: #{tpu_custom_call.1} parent=51 // pred_check_branch
          %429 = sbr.rel (%p427) target = $region72
        $region71: #{tpu_custom_call.1} parent=51 // pred_region
          %430 = dma.done [#allocation9], 1024
        $region72: #{tpu_custom_call.1} parent=51 // pred_fallthru
          _
        // Predicated region
        $region73: #{tpu_custom_call.1} parent=51 // pred_check
          %p431 = pneg %p167
        $region74: #{tpu_custom_call.1} parent=51 // pred_check_branch
          %433 = sbr.rel (%p431) target = $region76
        $region75: #{tpu_custom_call.1} parent=51 // pred_region
          %434 = dma.done [#allocation12], 16
        $region76: #{tpu_custom_call.1} parent=51 // pred_fallthru
          _
        // Predicated region
        $region77: #{tpu_custom_call.1} parent=51 // pred_check
          %p435 = pneg %p188
        $region78: #{tpu_custom_call.1} parent=51 // pred_check_branch
          %437 = sbr.rel (%p435) target = $region80
        $region79: #{tpu_custom_call.1} parent=51 // pred_region
          %438 = dma.done [#allocation12], 1024
        $region80: #{tpu_custom_call.1} parent=51 // pred_fallthru
          _
        // Predicated region
        $region81: #{tpu_custom_call.1} parent=51 // pred_check
          %p439 = pneg %p209
        $region82: #{tpu_custom_call.1} parent=51 // pred_check_branch
          %441 = sbr.rel (%p439) target = $region84
        $region83: #{tpu_custom_call.1} parent=51 // pred_region
          %442 = dma.done [#allocation15], 16
        $region84: #{tpu_custom_call.1} parent=51 // pred_fallthru
          _
        %s443 = sand.u32 %s44, 1
        %s444 = scalar_lea.sflag [#allocation3], %s443
        %s445 = sand.u32 %s44, 1
        %s446 = smul.addr %s445, 8
        %s447 = scalar_lea.vmem [#allocation2], %s446
        %p448 = pneg %p57
        %p449 = pneg %p54
        %s450 = sand.u32 %s36, 1
        %s451 = scalar_lea.sflag [#allocation6], %s450
        %s452 = sand.u32 %s70, 1
        %s453 = smul.addr %s452, 16
        %s454 = scalar_lea.vmem [#allocation5], %s453
        %p455 = pneg %p83
        %p456 = pneg %p80
        %p457 = pneg %p104
        %p458 = pneg %p101
        %p459 = pneg %p125
        %p460 = pneg %p122
        %p461 = pneg %p146
        %p462 = pneg %p143
        %p463 = pneg %p167
        %p464 = pneg %p164
        %p465 = pneg %p188
        %p466 = pneg %p185
        %p467 = pneg %p209
        %p468 = pneg %p206
        %p469 = pneg %p235
        %p470 = pneg %p232
        %s471 = sand.u32 %s222, 1
        %s472 = scalar_lea.sflag [#allocation4], %s471
        %s473 = sand.u32 %s222, 1
        %s474 = smul.addr %s473, 16
        %s475 = scalar_lea.vmem [#allocation16], %s474
        %p476 = pneg %p261
        %p477 = pneg %p258
        %s478 = sand.u32 %s248, 1
        %s479 = scalar_lea.sflag [#allocation18], %s478
        %s480 = sand.u32 %s248, 1
        %s481 = smul.addr %s480, 16
        %s482 = scalar_lea.vmem [#allocation17], %s481
        %s483 = smul.u32 2, %s36
        %s484 = smul.u32 2, %s36
        %s485 = smul.u32 2, %s36
        %s486 = smul.u32 2, %s36
        %v488 = vld [vmem:[%s405] sm:$0xf]
        %v489 = vld [vmem:[%s405 + $0x4] sm:$0xf]
        %v490 = vld [vmem:[#allocation7] sm:$0xff]
        %v491 = vld [vmem:[#allocation7 + $0x8] sm:$0xff]
        %v492 = vld [vmem:[#allocation7 + $0x10] sm:$0xff]
        %v493 = vld [vmem:[#allocation7 + $0x18] sm:$0xff]
        %v494 = vld [vmem:[#allocation8] sm:$0x3]
        %v496 = vlaneseq
        %v497 = vshrl.u32 %v496, 7
        %v498 = vsub.s32 0, %v497
        %v499 = vrot.slane %v494, %v498
        %v500 = vlaneseq
        %v501 = vshrl.u32 %v500, 7
        %v502 = vsub.s32 1, %v501
        %v503 = vrot.slane %v494, %v502
        %v508 = vunpack.c.l.b16 %v488
        %v509 = vunpack.c.l.b16 %v489
        %v510 = vpack.c.b16 %v509, %v508
        %v515 = vunpack.c.l.b16 %v490
        %v516 = vunpack.c.h.b16 %v490
        %v517 = vunpack.c.l.b16 %v491
        %v518 = vunpack.c.h.b16 %v491
        %v519 = vunpack.c.l.b16 %v492
        %v520 = vunpack.c.h.b16 %v492
        %v521 = vunpack.c.l.b16 %v493
        %v522 = vunpack.c.h.b16 %v493
        %v523 = vpack.c.b16 %v517, %v515
        %v524 = vpack.c.b16 %v518, %v516
        %v525 = vpack.c.b16 %v521, %v519
        %v526 = vpack.c.b16 %v522, %v520
        %vm531 = vcmask 261120
        %v533 = vsel %vm531, %v510, 0
        %535 = vmatprep.subr.bf16.mxu0 %v524
        %536 = vmatpush1.bf16.msra.mxu0 %v523
        %537 = vmatprep.subr.bf16.mxu0 %v526
        %538 = vmatpush1.bf16.msra.mxu0 %v525
        %539 = vmatprep.subr.bf16.mxu0 0
        %540 = vmatpush1.bf16.msra.mxu0 0
        %541 = vmatprep.subr.bf16.mxu0 0
        %542 = vmatpush1.bf16.msra.mxu0 0
        %543 = vmatprep.subr.bf16.mxu0 0
        %544 = vmatpush1.bf16.msra.mxu0 0
        %545 = vmatprep.subr.bf16.mxu0 0
        %546 = vmatpush1.bf16.msra.mxu0 0
        %547 = vmatprep.subr.bf16.mxu0 0
        %548 = vmatpush1.bf16.msra.mxu0 0
        %549 = vmatprep.subr.bf16.mxu0 0
        %550 = vmatpush1.bf16.msra.mxu0 0
        %551 = vmatprep.subr.bf16.mxu0 0
        %552 = vmatpush1.bf16.msra.mxu0 0
        %553 = vmatprep.subr.bf16.mxu0 0
        %554 = vmatpush1.bf16.msra.mxu0 0
        %555 = vmatprep.subr.bf16.mxu0 0
        %556 = vmatpush1.bf16.msra.mxu0 0
        %557 = vmatprep.subr.bf16.mxu0 0
        %558 = vmatpush1.bf16.msra.mxu0 0
        %559 = vmatprep.subr.bf16.mxu0 0
        %560 = vmatpush1.bf16.msra.mxu0 0
        %561 = vmatprep.subr.bf16.mxu0 0
        %562 = vmatpush1.bf16.msra.mxu0 0
        %563 = vmatprep.subr.bf16.mxu0 0
        %564 = vmatpush1.bf16.msra.mxu0 0
        %565 = vmatprep.subr.bf16.mxu0 0
        %566 = vmatpush1.bf16.msra.mxu0 0
        %567 = vmatprep.mubr.bf16.mxu0 0
        %568 = vmatmul.mubr.bf16.gmra.mrb[0].mxu0 %v533
        %v569 = vpop.f32.mrb[0].mxu0
        %v570 = vadd.f32 %v499, %v569
        %v571 = vpop.f32.mrb[0].mxu0
        %v572 = vadd.f32 %v503, %v571
        %v573 = vpop.f32.mrb[0].mxu0
        %v574 = vadd.f32 %v499, %v573
        %v575 = vpop.f32.mrb[0].mxu0
        %v576 = vadd.f32 %v503, %v575
        %577 = vdwg.mxu0
        %v578 = vmax.f32 %v570, 0.0
        %v579 = vmax.f32 %v574, 0.0
        %v580 = vpack.c.bf16 %v579, %v578
        %v581 = vld [vmem:[#allocation10] sm:$0xf]
        %v582 = vld [vmem:[#allocation10 + $0x4] sm:$0xf]
        %v583 = vld [vmem:[#allocation10 + $0x8] sm:$0xf]
        %v584 = vld [vmem:[#allocation10 + $0xc] sm:$0xf]
        %v585 = vld [vmem:[#allocation10 + $0x10] sm:$0xf]
        %v586 = vld [vmem:[#allocation10 + $0x14] sm:$0xf]
        %v587 = vld [vmem:[#allocation10 + $0x18] sm:$0xf]
        %v588 = vld [vmem:[#allocation10 + $0x1c] sm:$0xf]
        %v589 = vld [vmem:[#allocation10 + $0x20] sm:$0xf]
        %v590 = vld [vmem:[#allocation10 + $0x24] sm:$0xf]
        %v591 = vld [vmem:[#allocation10 + $0x28] sm:$0xf]
        %v592 = vld [vmem:[#allocation10 + $0x2c] sm:$0xf]
        %v593 = vld [vmem:[#allocation10 + $0x30] sm:$0xf]
        %v594 = vld [vmem:[#allocation10 + $0x34] sm:$0xf]
        %v595 = vld [vmem:[#allocation10 + $0x38] sm:$0xf]
        %v596 = vld [vmem:[#allocation10 + $0x3c] sm:$0xf]
        %v597 = vld [vmem:[#allocation11] sm:$0x1]
        %v599 = vlaneseq
        %v600 = vshrl.u32 %v599, 7
        %v601 = vsub.s32 0, %v600
        %v602 = vrot.slane %v597, %v601
        %v620 = vunpack.c.l.b16 %v581
        %v621 = vunpack.c.l.b16 %v582
        %v622 = vunpack.c.l.b16 %v583
        %v623 = vunpack.c.l.b16 %v584
        %v624 = vunpack.c.l.b16 %v585
        %v625 = vunpack.c.l.b16 %v586
        %v626 = vunpack.c.l.b16 %v587
        %v627 = vunpack.c.l.b16 %v588
        %v628 = vunpack.c.l.b16 %v589
        %v629 = vunpack.c.l.b16 %v590
        %v630 = vunpack.c.l.b16 %v591
        %v631 = vunpack.c.l.b16 %v592
        %v632 = vunpack.c.l.b16 %v593
        %v633 = vunpack.c.l.b16 %v594
        %v634 = vunpack.c.l.b16 %v595
        %v635 = vunpack.c.l.b16 %v596
        %v636 = vpack.c.b16 %v621, %v620
        %v637 = vpack.c.b16 %v623, %v622
        %v638 = vpack.c.b16 %v625, %v624
        %v639 = vpack.c.b16 %v627, %v626
        %v640 = vpack.c.b16 %v629, %v628
        %v641 = vpack.c.b16 %v631, %v630
        %v642 = vpack.c.b16 %v633, %v632
        %v643 = vpack.c.b16 %v635, %v634
        %652 = vmatprep.subr.bf16.mxu0 0
        %653 = vmatpush1.bf16.msra.mxu0 %v636
        %654 = vmatprep.subr.bf16.mxu0 0
        %655 = vmatpush1.bf16.msra.mxu0 %v637
        %656 = vmatprep.subr.bf16.mxu0 0
        %657 = vmatpush1.bf16.msra.mxu0 %v638
        %658 = vmatprep.subr.bf16.mxu0 0
        %659 = vmatpush1.bf16.msra.mxu0 %v639
        %660 = vmatprep.subr.bf16.mxu0 0
        %661 = vmatpush1.bf16.msra.mxu0 %v640
        %662 = vmatprep.subr.bf16.mxu0 0
        %663 = vmatpush1.bf16.msra.mxu0 %v641
        %664 = vmatprep.subr.bf16.mxu0 0
        %665 = vmatpush1.bf16.msra.mxu0 %v642
        %666 = vmatprep.subr.bf16.mxu0 0
        %667 = vmatpush1.bf16.msra.mxu0 %v643
        %668 = vmatprep.subr.bf16.mxu0 0
        %669 = vmatpush1.bf16.msra.mxu0 0
        %670 = vmatprep.subr.bf16.mxu0 0
        %671 = vmatpush1.bf16.msra.mxu0 0
        %672 = vmatprep.subr.bf16.mxu0 0
        %673 = vmatpush1.bf16.msra.mxu0 0
        %674 = vmatprep.subr.bf16.mxu0 0
        %675 = vmatpush1.bf16.msra.mxu0 0
        %676 = vmatprep.subr.bf16.mxu0 0
        %677 = vmatpush1.bf16.msra.mxu0 0
        %678 = vmatprep.subr.bf16.mxu0 0
        %679 = vmatpush1.bf16.msra.mxu0 0
        %680 = vmatprep.subr.bf16.mxu0 0
        %681 = vmatpush1.bf16.msra.mxu0 0
        %682 = vmatprep.subr.bf16.mxu0 0
        %683 = vmatpush1.bf16.msra.mxu0 0
        %684 = vmatprep.mubr.bf16.mxu0 0
        %685 = vmatmul.mubr.bf16.gmra.mrb[0].mxu0 %v580
        %v686 = vpop.f32.mrb[0].mxu0
        %v687 = vadd.f32 %v602, %v686
        %v688 = vpop.f32.mrb[0].mxu0
        %v689 = vpop.f32.mrb[0].mxu0
        %v690 = vadd.f32 %v602, %v689
        %v691 = vpop.f32.mrb[0].mxu0
        %692 = vdwg.mxu0
        %v693 = vmax.f32 %v687, 0.0
        %v694 = vmax.f32 %v690, 0.0
        %v695 = vpack.c.bf16 %v694, %v693
        %v696 = vld [vmem:[#allocation13] sm:$0xf]
        %v697 = vld [vmem:[#allocation13 + $0x4] sm:$0xf]
        %v698 = vld [vmem:[#allocation13 + $0x8] sm:$0xf]
        %v699 = vld [vmem:[#allocation13 + $0xc] sm:$0xf]
        %v700 = vld [vmem:[#allocation13 + $0x10] sm:$0xf]
        %v701 = vld [vmem:[#allocation13 + $0x14] sm:$0xf]
        %v702 = vld [vmem:[#allocation13 + $0x18] sm:$0xf]
        %v703 = vld [vmem:[#allocation13 + $0x1c] sm:$0xf]
        %v704 = vld [vmem:[#allocation13 + $0x20] sm:$0xf]
        %v705 = vld [vmem:[#allocation13 + $0x24] sm:$0xf]
        %v706 = vld [vmem:[#allocation13 + $0x28] sm:$0xf]
        %v707 = vld [vmem:[#allocation13 + $0x2c] sm:$0xf]
        %v708 = vld [vmem:[#allocation13 + $0x30] sm:$0xf]
        %v709 = vld [vmem:[#allocation13 + $0x34] sm:$0xf]
        %v710 = vld [vmem:[#allocation13 + $0x38] sm:$0xf]
        %v711 = vld [vmem:[#allocation13 + $0x3c] sm:$0xf]
        %v712 = vld [vmem:[#allocation14] sm:$0x1]
        %v714 = vlaneseq
        %v715 = vshrl.u32 %v714, 7
        %v716 = vsub.s32 0, %v715
        %v717 = vrot.slane %v712, %v716
        %v735 = vunpack.c.l.b16 %v696
        %v736 = vunpack.c.l.b16 %v697
        %v737 = vunpack.c.l.b16 %v698
        %v738 = vunpack.c.l.b16 %v699
        %v739 = vunpack.c.l.b16 %v700
        %v740 = vunpack.c.l.b16 %v701
        %v741 = vunpack.c.l.b16 %v702
        %v742 = vunpack.c.l.b16 %v703
        %v743 = vunpack.c.l.b16 %v704
        %v744 = vunpack.c.l.b16 %v705
        %v745 = vunpack.c.l.b16 %v706
        %v746 = vunpack.c.l.b16 %v707
        %v747 = vunpack.c.l.b16 %v708
        %v748 = vunpack.c.l.b16 %v709
        %v749 = vunpack.c.l.b16 %v710
        %v750 = vunpack.c.l.b16 %v711
        %v751 = vpack.c.b16 %v736, %v735
        %v752 = vpack.c.b16 %v738, %v737
        %v753 = vpack.c.b16 %v740, %v739
        %v754 = vpack.c.b16 %v742, %v741
        %v755 = vpack.c.b16 %v744, %v743
        %v756 = vpack.c.b16 %v746, %v745
        %v757 = vpack.c.b16 %v748, %v747
        %v758 = vpack.c.b16 %v750, %v749
        %767 = vmatprep.subr.bf16.mxu0 0
        %768 = vmatpush1.bf16.msra.mxu0 %v751
        %769 = vmatprep.subr.bf16.mxu0 0
        %770 = vmatpush1.bf16.msra.mxu0 %v752
        %771 = vmatprep.subr.bf16.mxu0 0
        %772 = vmatpush1.bf16.msra.mxu0 %v753
        %773 = vmatprep.subr.bf16.mxu0 0
        %774 = vmatpush1.bf16.msra.mxu0 %v754
        %775 = vmatprep.subr.bf16.mxu0 0
        %776 = vmatpush1.bf16.msra.mxu0 %v755
        %777 = vmatprep.subr.bf16.mxu0 0
        %778 = vmatpush1.bf16.msra.mxu0 %v756
        %779 = vmatprep.subr.bf16.mxu0 0
        %780 = vmatpush1.bf16.msra.mxu0 %v757
        %781 = vmatprep.subr.bf16.mxu0 0
        %782 = vmatpush1.bf16.msra.mxu0 %v758
        %783 = vmatprep.subr.bf16.mxu0 0
        %784 = vmatpush1.bf16.msra.mxu0 0
        %785 = vmatprep.subr.bf16.mxu0 0
        %786 = vmatpush1.bf16.msra.mxu0 0
        %787 = vmatprep.subr.bf16.mxu0 0
        %788 = vmatpush1.bf16.msra.mxu0 0
        %789 = vmatprep.subr.bf16.mxu0 0
        %790 = vmatpush1.bf16.msra.mxu0 0
        %791 = vmatprep.subr.bf16.mxu0 0
        %792 = vmatpush1.bf16.msra.mxu0 0
        %793 = vmatprep.subr.bf16.mxu0 0
        %794 = vmatpush1.bf16.msra.mxu0 0
        %795 = vmatprep.subr.bf16.mxu0 0
        %796 = vmatpush1.bf16.msra.mxu0 0
        %797 = vmatprep.subr.bf16.mxu0 0
        %798 = vmatpush1.bf16.msra.mxu0 0
        %799 = vmatprep.mubr.bf16.mxu0 0
        %800 = vmatmul.mubr.bf16.gmra.mrb[0].mxu0 %v695
        %v801 = vpop.f32.mrb[0].mxu0
        %v802 = vadd.f32 %v717, %v801
        %v803 = vpop.f32.mrb[0].mxu0
        %v804 = vpop.f32.mrb[0].mxu0
        %v805 = vadd.f32 %v717, %v804
        %v806 = vpop.f32.mrb[0].mxu0
        %807 = vdwg.mxu0
        %v808 = vld [vmem:[%s414] sm:$0xff]
        %v809 = vld [vmem:[%s414 + $0x8] sm:$0xff]
        %v810 = vadd.f32 %v802, %v808
        %v811 = vadd.f32 %v805, %v809
        %v812 = vxor.u32 %v810, 2147483648
        %v813 = vxor.u32 %v811, 2147483648
        %v814 = vmul.f32 %v812, 1.442695
        %v815 = vpow.pop %v814
        %v816 = vmul.f32 %v813, 1.442695
        %v817 = vpow.pop %v816
        %v818 = vadd.f32 %v815, 1.0
        %v819 = vadd.f32 %v817, 1.0
        %v820 = vrcp.pop %v818
        %v821 = vmul.f32 1.0, %v820
        %v822 = vrcp.pop %v819
        %v823 = vmul.f32 1.0, %v822
        %vm824 = vcmask 64512
        %825 = vst.msk [vmem:[%s475] sm:$0xff] %vm824, %v572
        %826 = vst.msk [vmem:[%s475 + $0x8] sm:$0xff] %vm824, %v576
        %vm827 = vcmask 31744
        %828 = vst.msk [vmem:[%s482] sm:$0xff] %vm827, %v821
        %829 = vst.msk [vmem:[%s482 + $0x8] sm:$0xff] %vm827, %v823
        %s830 = sand.u32 %s222, 1
        %s831 = scalar_lea.sflag [#allocation4], %s830
        %s832 = sand.u32 %s222, 1
        %s833 = smul.addr %s832, 16
        %s834 = scalar_lea.vmem [#allocation16], %s833
        %s835 = sand.u32 %s248, 1
        %s836 = scalar_lea.sflag [#allocation18], %s835
        %s837 = sand.u32 %s248, 1
        %s838 = smul.addr %s837, 16
        %s839 = scalar_lea.vmem [#allocation17], %s838
        // Predicated region
        $region85: #{tpu_custom_call.1} parent=51 // pred_check
          %p840 = pneg %p232
        $region86: #{tpu_custom_call.1} parent=51 // pred_check_branch
          %842 = sbr.rel (%p840) target = $region88
        $region87: #{tpu_custom_call.1} parent=51 // pred_region
          %s843 = smul.u32 2, %s36
          %s845 = ssub.s32 256, 256
          %846 = vsyncadd %s831, %s845
          %s847 = smul.addr %s843, 128
          %s848 = scalar_lea.hbm %s8, %s847
          %s849 = sshll.u32 %s834, 4
          %s850 = int_to_ptr.vmem [resolvable:$true] %s849
          %855 = dma.vmem_to_hbm [thread:$0]  %s850, 256, %s848, %s831, 128, 128, 8
        $region88: #{tpu_custom_call.1} parent=51 // pred_fallthru
          _
        // Predicated region
        $region89: #{tpu_custom_call.1} parent=51 // pred_check
          %p856 = pneg %p258
        $region90: #{tpu_custom_call.1} parent=51 // pred_check_branch
          %858 = sbr.rel (%p856) target = $region92
        $region91: #{tpu_custom_call.1} parent=51 // pred_region
          %s859 = smul.u32 2, %s36
          %s861 = ssub.s32 256, 256
          %862 = vsyncadd %s836, %s861
          %s863 = smul.addr %s859, 128
          %s864 = scalar_lea.hbm %s9, %s863
          %s865 = sshll.u32 %s839, 4
          %s866 = int_to_ptr.vmem [resolvable:$true] %s865
          %871 = dma.vmem_to_hbm [thread:$0]  %s866, 256, %s864, %s836, 128, 128, 8
        $region92: #{tpu_custom_call.1} parent=51 // pred_fallthru
          _
      $region52: #{tpu_custom_call.1} parent=5 // pred_fallthru
        _
      %p872 = scmp.le.s32.totalorder 2, %s31
      // Predicated region
      $region93: #{tpu_custom_call.1} parent=5 // pred_check
        %p873 = pneg %p872
      $region94: #{tpu_custom_call.1} parent=5 // pred_check_branch
        %875 = sbr.rel (%p873) target = $region96
      $region95: #{tpu_custom_call.1} parent=5 // pred_region
        %s876 = ssub.s32 %s31, 2
        // Predicated region
        $region97: #{tpu_custom_call.1} parent=95 // pred_check
          %p877 = pneg %p238
        $region98: #{tpu_custom_call.1} parent=95 // pred_check_branch
          %879 = sbr.rel (%p877) target = $region100
        $region99: #{tpu_custom_call.1} parent=95 // pred_region
          %s880 = sand.u32 %s223, 1
          %s881 = scalar_lea.sflag [#allocation4], %s880
          %s882 = sand.u32 %s223, 1
          %s883 = smul.addr %s882, 16
          %s884 = scalar_lea.vmem [#allocation16], %s883
          %885 = dma.done %s881, 256
        $region100: #{tpu_custom_call.1} parent=95 // pred_fallthru
          _
        // Predicated region
        $region101: #{tpu_custom_call.1} parent=95 // pred_check
          %p886 = pneg %p264
        $region102: #{tpu_custom_call.1} parent=95 // pred_check_branch
          %888 = sbr.rel (%p886) target = $region104
        $region103: #{tpu_custom_call.1} parent=95 // pred_region
          %s889 = sand.u32 %s249, 1
          %s890 = scalar_lea.sflag [#allocation18], %s889
          %s891 = sand.u32 %s249, 1
          %s892 = smul.addr %s891, 16
          %s893 = scalar_lea.vmem [#allocation17], %s892
          %894 = dma.done %s890, 256
        $region104: #{tpu_custom_call.1} parent=95 // pred_fallthru
          _
      $region96: #{tpu_custom_call.1} parent=5 // pred_fallthru
        _
    $region6: #{tpu_custom_call.1} parent=1 // loop_footer
      %s35 = sadd.s32 1, %s31
    $region7: #{tpu_custom_call.1} parent=1 // loop_footer_branch
      %30 = sbr.rel target = $region3
    $region8: #{tpu_custom_call.1} parent=1 // loop_exit
      _
    %895 = vsyncpa [#allocation3], 1
    %s896 = scalar_lea.sflag [#allocation3], 1
    %897 = vsyncpa %s896, 1
    %898 = vsyncpa [#allocation6], 1
    %s899 = scalar_lea.sflag [#allocation6], 1
    %900 = vsyncpa %s899, 1
    %901 = vsyncpa [#allocation9], 1
    %902 = vsyncpa [#allocation12], 1
    %903 = vsyncpa [#allocation15], 1
    %904 = vsyncpa [#allocation4], 1
    %s905 = scalar_lea.sflag [#allocation4], 1
    %906 = vsyncpa %s905, 1
    %907 = vsyncpa [#allocation18], 1
    %s908 = scalar_lea.sflag [#allocation18], 1
    %909 = vsyncpa %s908, 1

</llo_original>
